<compile_context>
chip_gen: v7x
topology: tpu7x:2x2x1
jax: 0.10.0
libtpu: 0.0.40
codegen_flags: <defaults>
</compile_context>

<pallas_src>
import functools

import jax
import jax.numpy as jnp
import numpy as np
from jax.experimental import pallas as pl
from jax.experimental.pallas import tpu as pltpu


# ----------------------------------------------------------------------------
# Kernels
# ----------------------------------------------------------------------------

def lstm_evolve_kernel(w0_ref, wi_ref, wg_ref, wo_ref, bi_ref, bg_ref, bo_ref,
                       w_new_ref):
    """One LSTM step (seq=1, batch=F, zero initial state) evolving the GCN weight.

    Per-gate input weights arrive pre-split and pre-transposed from the wrapper,
    so each gate is a small (F,F)@(F,F) MXU dot with no in-kernel lane slicing.
    The forget gate multiplies c0 == 0 and W_hh multiplies h0 == 0, so both are
    dropped (exact for this module's forward).
    """
    w0 = w0_ref[...]                                                   # (F, F)
    i_g = jax.nn.sigmoid(
        jnp.dot(w0, wi_ref[...], preferred_element_type=jnp.float32) + bi_ref[...])
    g_g = jnp.tanh(
        jnp.dot(w0, wg_ref[...], preferred_element_type=jnp.float32) + bg_ref[...])
    o_g = jax.nn.sigmoid(
        jnp.dot(w0, wo_ref[...], preferred_element_type=jnp.float32) + bo_ref[...])
    c = i_g * g_g
    w_new_ref[...] = o_g * jnp.tanh(c)                                 # (F, F)


def spmm_fused_kernel(a_ref, x_ref, w_ref, out_ref):
    """out[i_tile] += A[i_tile, k_tile] @ (X[k_tile] @ W).

    A is streamed bf16 (the HBM-bound stream); X and W are fully VMEM-resident
    (constant block index) and the XW slice is recomputed per (i, k) step --
    extra MXU work is ~F/tm of the A matmul and hides under the HBM bound.
    The output block index is constant across k, so it stays VMEM-resident and
    is used directly as the f32 accumulator (no scratch).
    """
    k = pl.program_id(1)
    tk = a_ref.shape[1]

    @pl.when(k == 0)
    def _init():
        out_ref[...] = jnp.zeros_like(out_ref)

    start = pl.multiple_of(k * tk, 128)                   # tk is always a multiple of 128
    x_k = x_ref[pl.ds(start, tk), :]                      # (tk, F) bf16, sliced from resident X
    xw_k = jnp.dot(x_k, w_ref[...],
                   preferred_element_type=jnp.float32).astype(jnp.bfloat16)
    out_ref[...] += jnp.dot(a_ref[...], xw_k,
                            preferred_element_type=jnp.float32)


# ----------------------------------------------------------------------------
# Plain-JAX glue: dense symmetric-normalized adjacency (PyG gcn_norm semantics),
# scattered directly into the padded buffer used by the spmm kernel.
# ----------------------------------------------------------------------------

def gcn_norm_padded(edge_index, edge_weight, num_nodes, rows_pad, cols_pad,
                    improved=False):
    """Dense D^-1/2 (A + fill*I) D^-1/2 built directly at padded shape
    (rows_pad, cols_pad), following PyG's add_remaining_self_loops: existing
    self-loops keep their weight; missing ones are added with `fill`.
    Scatter-add is done in f32; the (single) cast to bf16 happens in the caller.
    """
    fill = 2.0 if improved else 1.0
    row, col = edge_index[0], edge_index[1]
    if edge_weight is None:
        edge_weight = jnp.ones(row.shape[0], dtype=jnp.float32)
    edge_weight = edge_weight.astype(jnp.float32)

    is_loop = row == col
    # Existing self-loop edges are removed (weight zeroed) and re-added once per
    # node; nodes that already had a self-loop keep its weight, others get `fill`.
    # (Duplicate self-loops: "last write wins", order-unspecified, matching PyG
    #  only up to that ambiguity.)
    loop_idx = jnp.where(is_loop, row, num_nodes)          # OOB index -> dropped
    loop_w = jnp.full((num_nodes,), fill, jnp.float32).at[loop_idx].set(
        edge_weight, mode="drop")
    ew_kept = jnp.where(is_loop, 0.0, edge_weight)

    loop = jnp.arange(num_nodes)
    row_all = jnp.concatenate([row, loop])
    col_all = jnp.concatenate([col, loop])
    ew_all = jnp.concatenate([ew_kept, loop_w])

    deg = jnp.zeros(num_nodes, jnp.float32).at[col_all].add(ew_all)
    dinv = jnp.where(deg > 0, 1.0 / jnp.sqrt(deg), 0.0)
    norm = dinv[row_all] * ew_all * dinv[col_all]
    # A_hat[target, source] so that out[i] = sum_j A_hat[i, j] * x[j];
    # scatter straight into the padded f32 buffer (no later jnp.pad copy).
    a_hat = jnp.zeros((rows_pad, cols_pad), jnp.float32).at[col_all, row_all].add(norm)
    return a_hat


def _round_up(x, m):
    return (x + m - 1) // m * m


def _pick_tile(n, target, align):
    """Tile size <= ~target with minimal padding: n is split into
    ceil(n/target) tiles, each rounded up to `align`."""
    num = max(1, -(-n // target))
    tile = _round_up(-(-n // num), align)
    return tile, tile * num                                # (tile, padded_extent)


# ----------------------------------------------------------------------------
# Wrapper
# ----------------------------------------------------------------------------

@functools.partial(jax.jit, static_argnames=("improved",))
def evolve_gcno_forward(x, edge_index, edge_weight,
                        gcn_weight, lstm_w_ih, lstm_b_ih, lstm_b_hh,
                        improved=False):
    n, f = x.shape

    # ---- 1) LSTM weight evolution (tiny whole-array kernel, runs once) -------
    b = lstm_b_ih + lstm_b_hh                              # (4F,), gate order [i, f, g, o]
    wi_t = lstm_w_ih[0 * f:1 * f].T                        # (F, F)
    wg_t = lstm_w_ih[2 * f:3 * f].T
    wo_t = lstm_w_ih[3 * f:4 * f].T
    bi = b[0 * f:1 * f][None, :]                           # (1, F)
    bg = b[2 * f:3 * f][None, :]
    bo = b[3 * f:4 * f][None, :]
    # TODO(synk): LSTM weight_hh_l0 / forget gate are not materialized — with
    # seq_len=1 and zero initial (h, c) their contribution is identically zero.

    vmem = pl.BlockSpec(memory_space=pltpu.MemorySpace.VMEM)
    w_new = pl.pallas_call(
        lstm_evolve_kernel,
        out_shape=jax.ShapeDtypeStruct((f, f), jnp.float32),
        in_specs=[vmem] * 7,
        out_specs=vmem,
    )(gcn_weight, wi_t, wg_t, wo_t, bi, bg, bo)

    # ---- 2) tile / padding selection (rows and cols padded independently) ----
    tm, rows_pad = _pick_tile(n, 256, 8)                   # i axis (parallel, >=2 tiles when n>256)
    tk, cols_pad = _pick_tile(n, 8192, 128)                # k axis (reduction): multi-MiB A blocks

    # ---- 3) A_hat scattered directly into the padded buffer, single bf16 cast
    a_bf16 = gcn_norm_padded(edge_index, edge_weight, n, rows_pad, cols_pad,
                             improved=improved).astype(jnp.bfloat16)
    x_bf16 = jnp.pad(x, ((0, cols_pad - n), (0, 0))).astype(jnp.bfloat16)
    w_bf16 = w_new.astype(jnp.bfloat16)

    # ---- 4) fused spmm: out = A_hat @ (X @ W_new), f32 accumulation in out ---
    vmem_need = (2 * tm * tk * 2           # double-buffered A tiles (bf16)
                 + cols_pad * f * 2        # resident X (bf16)
                 + f * f * 2               # resident W (bf16)
                 + 2 * tm * f * 4          # output block (f32)
                 + tk * f * 6)             # xw_k intermediates (f32 + bf16)
    vmem_limit = int(min(max(vmem_need + (4 << 20), 32 << 20), 48 << 20))

    out = pl.pallas_call(
        spmm_fused_kernel,
        out_shape=jax.ShapeDtypeStruct((rows_pad, f), jnp.float32),
        grid_spec=pltpu.PrefetchScalarGridSpec(
            num_scalar_prefetch=0,
            grid=(rows_pad // tm, cols_pad // tk),
            in_specs=[pl.BlockSpec((tm, tk), lambda i, k: (i, k)),      # streamed A
                      pl.BlockSpec((cols_pad, f), lambda i, k: (0, 0)),  # resident X
                      pl.BlockSpec((f, f), lambda i, k: (0, 0))],        # resident W
            out_specs=pl.BlockSpec((tm, f), lambda i, k: (i, 0)),
        ),
        compiler_params=pltpu.CompilerParams(
            dimension_semantics=("parallel", "arbitrary"),
            vmem_limit_bytes=vmem_limit),
    )(a_bf16, x_bf16, w_bf16)

    return out[:n], w_new


# ----------------------------------------------------------------------------
# Pure-JAX reference (for a loose sanity check)
# ----------------------------------------------------------------------------

def _reference(x, edge_index, gcn_weight, lstm_w_ih, lstm_b_ih, lstm_b_hh):
    n, f = x.shape
    b = lstm_b_ih + lstm_b_hh
    gates = gcn_weight @ lstm_w_ih.T + b[None, :]          # (F, 4F), order [i, f, g, o]
    i_g = jax.nn.sigmoid(gates[:, 0 * f:1 * f])
    g_g = jnp.tanh(gates[:, 2 * f:3 * f])
    o_g = jax.nn.sigmoid(gates[:, 3 * f:4 * f])
    w_new = o_g * jnp.tanh(i_g * g_g)
    a_hat = gcn_norm_padded(edge_index, None, n, n, n)
    return a_hat @ (x @ w_new), w_new


if __name__ == "__main__":
    N, F, E = 300, 32, 1024   # nodes, in_channels (= out_channels), edges

    key = jax.random.PRNGKey(0)
    k_x, k_src, k_dst, k_w, k_wih, k_bih, k_bhh = jax.random.split(key, 7)

    X = jax.random.normal(k_x, (N, F), jnp.float32)
    src = jax.random.randint(k_src, (E,), 0, N)
    dst = jax.random.randint(k_dst, (E,), 0, N)
    edge_index = jnp.stack([src, dst])                     # (2, E), int32

    # Deterministic parameter init (shapes follow the PyTorch module's __init__):
    # GCNConv.weight: (F, F) glorot-uniform; LSTM: weight_ih (4F, F), biases (4F,)
    limit = (6.0 / (F + F)) ** 0.5
    gcn_weight = jax.random.uniform(k_w, (F, F), jnp.float32, -limit, limit)
    k = 1.0 / (F ** 0.5)
    lstm_w_ih = jax.random.uniform(k_wih, (4 * F, F), jnp.float32, -k, k)
    lstm_b_ih = jax.random.uniform(k_bih, (4 * F,), jnp.float32, -k, k)
    lstm_b_hh = jax.random.uniform(k_bhh, (4 * F,), jnp.float32, -k, k)

    out, w_new = evolve_gcno_forward(X, edge_index, None,
                                     gcn_weight, lstm_w_ih, lstm_b_ih, lstm_b_hh)
    jax.block_until_ready(out)

    # Loose sanity check vs pure-JAX reference (A / X / W are streamed in bf16).
    ref_out, ref_w = _reference(X, edge_index, gcn_weight,
                                lstm_w_ih, lstm_b_ih, lstm_b_hh)
    np.testing.assert_allclose(np.asarray(w_new), np.asarray(ref_w),
                               rtol=1e-5, atol=1e-5)
    np.testing.assert_allclose(np.asarray(out), np.asarray(ref_out),
                               rtol=1e-1, atol=1e-1)

    print("KERNEL_OK")
</pallas_src>

<mosaic_0001>
module attributes {stable_mosaic.version = 11 : i64} {
  func.func @lstm_evolve_kernel(%arg0: memref<32x32xf32, #tpu.memory_space<vmem>>, %arg1: memref<32x32xf32, #tpu.memory_space<vmem>>, %arg2: memref<32x32xf32, #tpu.memory_space<vmem>>, %arg3: memref<32x32xf32, #tpu.memory_space<vmem>>, %arg4: memref<1x32xf32, #tpu.memory_space<vmem>>, %arg5: memref<1x32xf32, #tpu.memory_space<vmem>>, %arg6: memref<1x32xf32, #tpu.memory_space<vmem>>, %arg7: memref<32x32xf32, #tpu.memory_space<vmem>>) attributes {dimension_semantics = [], scalar_prefetch = 0 : i64, scratch_operands = 0 : i64, tpu.core_type = #tpu.core_type<tc>} {
    %c0 = arith.constant 0 : index
    %c0_0 = arith.constant 0 : index
    %0 = vector.load %arg0[%c0, %c0_0] : memref<32x32xf32, #tpu.memory_space<vmem>>, vector<32x32xf32>
    %c0_1 = arith.constant 0 : index
    %c0_2 = arith.constant 0 : index
    %1 = vector.load %arg1[%c0_1, %c0_2] : memref<32x32xf32, #tpu.memory_space<vmem>>, vector<32x32xf32>
    %cst = arith.constant dense<0.000000e+00> : vector<32x32xf32>
    %2 = tpu.matmul %0, %1, %cst {dimension_numbers = #tpu.dot_dimension_numbers<[1], [0], [0], [1], [0, 0, 1, 1], [], []>} : vector<32x32xf32>, vector<32x32xf32>, vector<32x32xf32> -> vector<32x32xf32>
    %c0_3 = arith.constant 0 : index
    %c0_4 = arith.constant 0 : index
    %3 = vector.load %arg4[%c0_3, %c0_4] : memref<1x32xf32, #tpu.memory_space<vmem>>, vector<1x32xf32>
    %4 = vector.broadcast %3 : vector<1x32xf32> to vector<32x32xf32>
    %5 = arith.addf %2, %4 : vector<32x32xf32>
    %6 = arith.negf %5 : vector<32x32xf32>
    %7 = math.exp %6 : vector<32x32xf32>
    %cst_5 = arith.constant 1.000000e+00 : f32
    %8 = vector.broadcast %cst_5 : f32 to vector<32x32xf32>
    %9 = arith.addf %8, %7 : vector<32x32xf32>
    %10 = arith.divf %8, %9 : vector<32x32xf32>
    %c0_6 = arith.constant 0 : index
    %c0_7 = arith.constant 0 : index
    %11 = vector.load %arg2[%c0_6, %c0_7] : memref<32x32xf32, #tpu.memory_space<vmem>>, vector<32x32xf32>
    %cst_8 = arith.constant dense<0.000000e+00> : vector<32x32xf32>
    %12 = tpu.matmul %0, %11, %cst_8 {dimension_numbers = #tpu.dot_dimension_numbers<[1], [0], [0], [1], [0, 0, 1, 1], [], []>} : vector<32x32xf32>, vector<32x32xf32>, vector<32x32xf32> -> vector<32x32xf32>
    %c0_9 = arith.constant 0 : index
    %c0_10 = arith.constant 0 : index
    %13 = vector.load %arg5[%c0_9, %c0_10] : memref<1x32xf32, #tpu.memory_space<vmem>>, vector<1x32xf32>
    %14 = vector.broadcast %13 : vector<1x32xf32> to vector<32x32xf32>
    %15 = arith.addf %12, %14 : vector<32x32xf32>
    %16 = math.tanh %15 : vector<32x32xf32>
    %c0_11 = arith.constant 0 : index
    %c0_12 = arith.constant 0 : index
    %17 = vector.load %arg3[%c0_11, %c0_12] : memref<32x32xf32, #tpu.memory_space<vmem>>, vector<32x32xf32>
    %cst_13 = arith.constant dense<0.000000e+00> : vector<32x32xf32>
    %18 = tpu.matmul %0, %17, %cst_13 {dimension_numbers = #tpu.dot_dimension_numbers<[1], [0], [0], [1], [0, 0, 1, 1], [], []>} : vector<32x32xf32>, vector<32x32xf32>, vector<32x32xf32> -> vector<32x32xf32>
    %c0_14 = arith.constant 0 : index
    %c0_15 = arith.constant 0 : index
    %19 = vector.load %arg6[%c0_14, %c0_15] : memref<1x32xf32, #tpu.memory_space<vmem>>, vector<1x32xf32>
    %20 = vector.broadcast %19 : vector<1x32xf32> to vector<32x32xf32>
    %21 = arith.addf %18, %20 : vector<32x32xf32>
    %22 = arith.negf %21 : vector<32x32xf32>
    %23 = math.exp %22 : vector<32x32xf32>
    %cst_16 = arith.constant 1.000000e+00 : f32
    %24 = vector.broadcast %cst_16 : f32 to vector<32x32xf32>
    %25 = arith.addf %24, %23 : vector<32x32xf32>
    %26 = arith.divf %24, %25 : vector<32x32xf32>
    %27 = arith.mulf %10, %16 : vector<32x32xf32>
    %28 = math.tanh %27 : vector<32x32xf32>
    %29 = arith.mulf %26, %28 : vector<32x32xf32>
    %c0_17 = arith.constant 0 : index
    %c0_18 = arith.constant 0 : index
    %30 = vector.load %arg7[%c0_17, %c0_18] : memref<32x32xf32, #tpu.memory_space<vmem>>, vector<32x32xf32>
    tpu.vector_store %arg7[%c0_17, %c0_18], %29 {strides = array<i32>} : memref<32x32xf32, #tpu.memory_space<vmem>>, vector<32x32xf32>,
    return
  }
}

module attributes {stable_mosaic.version = 11 : i64} {
  func.func @spmm_fused_kernel(%arg0: i32, %arg1: i32, %arg2: memref<152x384xbf16, #tpu.memory_space<vmem>>, %arg3: memref<384x32xbf16, #tpu.memory_space<vmem>>, %arg4: memref<32x32xbf16, #tpu.memory_space<vmem>>, %arg5: memref<152x32xf32, #tpu.memory_space<vmem>>) attributes {dimension_semantics = [#tpu.dimension_semantics<parallel>, #tpu.dimension_semantics<arbitrary>], iteration_bounds = array<i64: 2, 1>, scalar_prefetch = 0 : i64, scratch_operands = 0 : i64, tpu.core_type = #tpu.core_type<tc>, window_params = [{transform_indices = @transform_0, window_bounds = array<i64: 152, 384>}, {pipeline_mode = #tpu.pipeline_mode<synchronous>, transform_indices = @transform_1, window_bounds = array<i64: 384, 32>}, {pipeline_mode = #tpu.pipeline_mode<synchronous>, transform_indices = @transform_2, window_bounds = array<i64: 32, 32>}, {transform_indices = @transform_3, window_bounds = array<i64: 152, 32>}]} {
    %c0_i32 = arith.constant 0 : i32
    %0 = arith.cmpi eq, %arg1, %c0_i32 : i32
    %1 = arith.extui %0 : i1 to i32
    %c0_i32_0 = arith.constant 0 : i32
    %2 = arith.cmpi ne, %1, %c0_i32_0 : i32
    scf.if %2 {
      %cst_10 = arith.constant 0.000000e+00 : f32
      %15 = vector.broadcast %cst_10 : f32 to vector<152x32xf32>
      %c0_11 = arith.constant 0 : index
      %c0_12 = arith.constant 0 : index
      %16 = vector.load %arg5[%c0_11, %c0_12] : memref<152x32xf32, #tpu.memory_space<vmem>>, vector<152x32xf32>
      tpu.vector_store %arg5[%c0_11, %c0_12], %15 {strides = array<i32>} : memref<152x32xf32, #tpu.memory_space<vmem>>, vector<152x32xf32>,
    } else {
    }
    %c384_i32 = arith.constant 384 : i32
    %3 = arith.muli %arg1, %c384_i32 : i32
    %4 = tpu.assume_multiple %3, 128 : i32
    %5 = arith.index_cast %4 : i32 to index
    %c0 = arith.constant 0 : index
    %6 = vector.load %arg3[%5, %c0] : memref<384x32xbf16, #tpu.memory_space<vmem>>, vector<384x32xbf16>
    %c0_1 = arith.constant 0 : index
    %c0_2 = arith.constant 0 : index
    %7 = vector.load %arg4[%c0_1, %c0_2] : memref<32x32xbf16, #tpu.memory_space<vmem>>, vector<32x32xbf16>
    %cst = arith.constant dense<0.000000e+00> : vector<384x32xf32>
    %8 = tpu.matmul %6, %7, %cst {dimension_numbers = #tpu.dot_dimension_numbers<[1], [0], [0], [1], [0, 0, 1, 1], [], []>} : vector<384x32xbf16>, vector<32x32xbf16>, vector<384x32xf32> -> vector<384x32xf32>
    %9 = arith.truncf %8 : vector<384x32xf32> to vector<384x32xbf16>
    %c0_3 = arith.constant 0 : index
    %c0_4 = arith.constant 0 : index
    %10 = vector.load %arg5[%c0_3, %c0_4] : memref<152x32xf32, #tpu.memory_space<vmem>>, vector<152x32xf32>
    %c0_5 = arith.constant 0 : index
    %c0_6 = arith.constant 0 : index
    %11 = vector.load %arg2[%c0_5, %c0_6] : memref<152x384xbf16, #tpu.memory_space<vmem>>, vector<152x384xbf16>
    %cst_7 = arith.constant dense<0.000000e+00> : vector<152x32xf32>
    %12 = tpu.matmul %11, %9, %cst_7 {dimension_numbers = #tpu.dot_dimension_numbers<[1], [0], [0], [1], [0, 0, 1, 1], [], []>} : vector<152x384xbf16>, vector<384x32xbf16>, vector<152x32xf32> -> vector<152x32xf32>
    %13 = arith.addf %10, %12 : vector<152x32xf32>
    %c0_8 = arith.constant 0 : index
    %c0_9 = arith.constant 0 : index
    %14 = vector.load %arg5[%c0_8, %c0_9] : memref<152x32xf32, #tpu.memory_space<vmem>>, vector<152x32xf32>
    tpu.vector_store %arg5[%c0_8, %c0_9], %13 {strides = array<i32>} : memref<152x32xf32, #tpu.memory_space<vmem>>, vector<152x32xf32>,
    return
  }
  func.func @transform_0(%arg0: i32, %arg1: i32) -> (i32, i32) {
    %c0_i32 = arith.constant 0 : i32
    return %arg0, %arg1 : i32, i32
  }
  func.func @transform_1(%arg0: i32, %arg1: i32) -> (i32, i32) {
    %c0_i32 = arith.constant 0 : i32
    %c0_i32_0 = arith.constant 0 : i32
    %c0_i32_1 = arith.constant 0 : i32
    return %c0_i32, %c0_i32_0 : i32, i32
  }
  func.func @transform_2(%arg0: i32, %arg1: i32) -> (i32, i32) {
    %c0_i32 = arith.constant 0 : i32
    %c0_i32_0 = arith.constant 0 : i32
    %c0_i32_1 = arith.constant 0 : i32
    return %c0_i32, %c0_i32_0 : i32, i32
  }
  func.func @transform_3(%arg0: i32, %arg1: i32) -> (i32, i32) {
    %c0_i32 = arith.constant 0 : i32
    %c0_i32_0 = arith.constant 0 : i32
    return %arg0, %c0_i32 : i32, i32
  }
}

</mosaic_0001>

<llo_original>
// kernel: evolve_gcno_forward.2
$region0: #{evolve_gcno_forward.2}
  #allocation0 [shape = 'u32[]', space=smem, size = 0x4, offset = 0x4, fixed_abs, tag = 'smem constant byte address 0x4 - core index']
  #allocation1 [shape = 'u32[144,128]{1,0:T(1,128)}', space=vmem, size = 0x12000, scoped, tag = 'internal scratch']
  %s0 = inlined_call_operand.vmem [shape: f32[32,32], index: 0, kind: input, shape index: {}]
  %s1 = inlined_call_operand.vmem [shape: f32[32,32], index: 1, kind: input, shape index: {}]
  %s2 = inlined_call_operand.vmem [shape: f32[32,32], index: 2, kind: input, shape index: {}]
  %s3 = inlined_call_operand.vmem [shape: f32[32,32], index: 3, kind: input, shape index: {}]
  %s4 = inlined_call_operand.vmem [shape: f32[1,32], index: 4, kind: input, shape index: {}]
  %s5 = inlined_call_operand.vmem [shape: f32[1,32], index: 5, kind: input, shape index: {}]
  %s6 = inlined_call_operand.vmem [shape: f32[1,32], index: 6, kind: input, shape index: {}]
  %s7 = inlined_call_operand.vmem [shape: f32[32,32], index: 7, kind: output, shape index: {}]
  %s8 = sld [smem:[#allocation0]]
  $region38: #{evolve_gcno_forward.2} parent=0
    _
  %s10 = ssub.s32 1, %s8
  %s11 = scalar_select 0, %s10, %s8
  // Predicated region
  $region2: #{evolve_gcno_forward.2} parent=0 // pred_check
    _
  $region3: #{evolve_gcno_forward.2} parent=0 // pred_check_branch
    %13 = sbr.rel (0) target = $region5
  $region4: #{evolve_gcno_forward.2} parent=0 // pred_region
    _
  $region5: #{evolve_gcno_forward.2} parent=0 // pred_fallthru
    _
  // Predicated region
  $region6: #{evolve_gcno_forward.2} parent=0 // pred_check
    _
  $region7: #{evolve_gcno_forward.2} parent=0 // pred_check_branch
    %15 = sbr.rel (0) target = $region9
  $region8: #{evolve_gcno_forward.2} parent=0 // pred_region
    _
  $region9: #{evolve_gcno_forward.2} parent=0 // pred_fallthru
    _
  // Predicated region
  $region10: #{evolve_gcno_forward.2} parent=0 // pred_check
    _
  $region11: #{evolve_gcno_forward.2} parent=0 // pred_check_branch
    %17 = sbr.rel (0) target = $region13
  $region12: #{evolve_gcno_forward.2} parent=0 // pred_region
    _
  $region13: #{evolve_gcno_forward.2} parent=0 // pred_fallthru
    _
  // Predicated region
  $region14: #{evolve_gcno_forward.2} parent=0 // pred_check
    _
  $region15: #{evolve_gcno_forward.2} parent=0 // pred_check_branch
    %19 = sbr.rel (0) target = $region17
  $region16: #{evolve_gcno_forward.2} parent=0 // pred_region
    _
  $region17: #{evolve_gcno_forward.2} parent=0 // pred_fallthru
    _
  // Predicated region
  $region18: #{evolve_gcno_forward.2} parent=0 // pred_check
    _
  $region19: #{evolve_gcno_forward.2} parent=0 // pred_check_branch
    %21 = sbr.rel (0) target = $region21
  $region20: #{evolve_gcno_forward.2} parent=0 // pred_region
    _
  $region21: #{evolve_gcno_forward.2} parent=0 // pred_fallthru
    _
  // Predicated region
  $region22: #{evolve_gcno_forward.2} parent=0 // pred_check
    _
  $region23: #{evolve_gcno_forward.2} parent=0 // pred_check_branch
    %23 = sbr.rel (0) target = $region25
  $region24: #{evolve_gcno_forward.2} parent=0 // pred_region
    _
  $region25: #{evolve_gcno_forward.2} parent=0 // pred_fallthru
    _
  // Predicated region
  $region26: #{evolve_gcno_forward.2} parent=0 // pred_check
    _
  $region27: #{evolve_gcno_forward.2} parent=0 // pred_check_branch
    %25 = sbr.rel (0) target = $region29
  $region28: #{evolve_gcno_forward.2} parent=0 // pred_region
    _
  $region29: #{evolve_gcno_forward.2} parent=0 // pred_fallthru
    _
  %v26 = vld [vmem:[%s0] sm:$0xff]
  %v27 = vld [vmem:[%s0 + $0x8] sm:$0xff]
  %v28 = vld [vmem:[%s0 + $0x10] sm:$0xff]
  %v29 = vld [vmem:[%s0 + $0x18] sm:$0xff]
  %v30 = vld [vmem:[%s1] sm:$0xff]
  %v31 = vld [vmem:[%s1 + $0x8] sm:$0xff]
  %v32 = vld [vmem:[%s1 + $0x10] sm:$0xff]
  %v33 = vld [vmem:[%s1 + $0x18] sm:$0xff]
  %v34 = vld [vmem:[%s4] sm:$0x1]
  %v36 = vlaneseq
  %v37 = vshrl.u32 %v36, 7
  %v38 = vsub.s32 0, %v37
  %v39 = vrot.slane %v34, %v38
  %vm41 = vcmask 261120
  %v43 = vsel %vm41, %v26, 0
  %v46 = vsel %vm41, %v27, 0
  %v49 = vsel %vm41, %v28, 0
  %v52 = vsel %vm41, %v29, 0
  %54 = vmatprep.subr.mxu0 0.0
  %55 = vmatpush1.msra.mxu0 %v30
  %56 = vmatprep.subr.mxu0 0.0
  %57 = vmatpush1.msra.mxu0 %v31
  %58 = vmatprep.subr.mxu0 0.0
  %59 = vmatpush1.msra.mxu0 %v32
  %60 = vmatprep.subr.mxu0 0.0
  %61 = vmatpush1.msra.mxu0 %v33
  %62 = vmatprep.subr.mxu0 0.0
  %63 = vmatpush1.msra.mxu0 0.0
  %64 = vmatprep.subr.mxu0 0.0
  %65 = vmatpush1.msra.mxu0 0.0
  %66 = vmatprep.subr.mxu0 0.0
  %67 = vmatpush1.msra.mxu0 0.0
  %68 = vmatprep.subr.mxu0 0.0
  %69 = vmatpush1.msra.mxu0 0.0
  %70 = vmatprep.subr.mxu0 0.0
  %71 = vmatpush1.msra.mxu0 0.0
  %72 = vmatprep.subr.mxu0 0.0
  %73 = vmatpush1.msra.mxu0 0.0
  %74 = vmatprep.subr.mxu0 0.0
  %75 = vmatpush1.msra.mxu0 0.0
  %76 = vmatprep.subr.mxu0 0.0
  %77 = vmatpush1.msra.mxu0 0.0
  %78 = vmatprep.subr.mxu0 0.0
  %79 = vmatpush1.msra.mxu0 0.0
  %80 = vmatprep.subr.mxu0 0.0
  %81 = vmatpush1.msra.mxu0 0.0
  %82 = vmatprep.subr.mxu0 0.0
  %83 = vmatpush1.msra.mxu0 0.0
  %84 = vmatprep.subr.mxu0 0.0
  %85 = vmatpush1.msra.mxu0 0.0
  %86 = vmatprep.subr.mxu0 0.0
  %87 = vmatpush1.msra.mxu0 0.0
  %88 = vmatprep.subr.mxu0 0.0
  %89 = vmatpush1.msra.mxu0 0.0
  %90 = vmatprep.subr.mxu0 0.0
  %91 = vmatpush1.msra.mxu0 0.0
  %92 = vmatprep.subr.mxu0 0.0
  %93 = vmatpush1.msra.mxu0 0.0
  %94 = vmatprep.subr.mxu0 0.0
  %95 = vmatpush1.msra.mxu0 0.0
  %96 = vmatprep.subr.mxu0 0.0
  %97 = vmatpush1.msra.mxu0 0.0
  %98 = vmatprep.subr.mxu0 0.0
  %99 = vmatpush1.msra.mxu0 0.0
  %100 = vmatprep.subr.mxu0 0.0
  %101 = vmatpush1.msra.mxu0 0.0
  %102 = vmatprep.subr.mxu0 0.0
  %103 = vmatpush1.msra.mxu0 0.0
  %104 = vmatprep.subr.mxu0 0.0
  %105 = vmatpush1.msra.mxu0 0.0
  %106 = vmatprep.subr.mxu0 0.0
  %107 = vmatpush1.msra.mxu0 0.0
  %108 = vmatprep.subr.mxu0 0.0
  %109 = vmatpush1.msra.mxu0 0.0
  %110 = vmatprep.subr.mxu0 0.0
  %111 = vmatpush1.msra.mxu0 0.0
  %112 = vmatprep.subr.mxu0 0.0
  %113 = vmatpush1.msra.mxu0 0.0
  %114 = vmatprep.subr.mxu0 0.0
  %115 = vmatpush1.msra.mxu0 0.0
  %116 = vmatprep.subr.mxu0 0.0
  %117 = vmatpush1.msra.mxu0 0.0
  %118 = vmatprep.mubr.f32.mxu0 0.0
  %119 = vmatmul.mubr.f32.gmra.mrb[0].mxu0 %v43
  %v120 = vpop.f32.mrb[0].mxu0
  %v121 = vadd.f32 %v39, %v120
  %v122 = vpop.f32.mrb[0].mxu0
  %123 = vmatprep.mubr.f32.mxu0 0.0
  %124 = vmatmul.mubr.f32.gmra.mrb[0].mxu0 %v46
  %v125 = vpop.f32.mrb[0].mxu0
  %v126 = vadd.f32 %v39, %v125
  %v127 = vpop.f32.mrb[0].mxu0
  %128 = vmatprep.mubr.f32.mxu0 0.0
  %129 = vmatmul.mubr.f32.gmra.mrb[0].mxu0 %v49
  %v130 = vpop.f32.mrb[0].mxu0
  %v131 = vadd.f32 %v39, %v130
  %v132 = vpop.f32.mrb[0].mxu0
  %133 = vmatprep.mubr.f32.mxu0 0.0
  %134 = vmatmul.mubr.f32.gmra.mrb[0].mxu0 %v52
  %v135 = vpop.f32.mrb[0].mxu0
  %v136 = vadd.f32 %v39, %v135
  %v137 = vpop.f32.mrb[0].mxu0
  %138 = vdwg.mxu0
  %v139 = vxor.u32 %v121, 2147483648
  %v140 = vxor.u32 %v126, 2147483648
  %v141 = vxor.u32 %v131, 2147483648
  %v142 = vxor.u32 %v136, 2147483648
  %v143 = vmul.f32 %v139, 1.442695
  %v144 = vpow.pop %v143
  %v145 = vmul.f32 %v140, 1.442695
  %v146 = vpow.pop %v145
  %v147 = vmul.f32 %v141, 1.442695
  %v148 = vpow.pop %v147
  %v149 = vmul.f32 %v142, 1.442695
  %v150 = vpow.pop %v149
  %v151 = vadd.f32 %v144, 1.0
  %v152 = vadd.f32 %v146, 1.0
  %v153 = vadd.f32 %v148, 1.0
  %v154 = vadd.f32 %v150, 1.0
  %v155 = vrcp.pop %v151
  %v156 = vmul.f32 1.0, %v155
  %v157 = vrcp.pop %v152
  %v158 = vmul.f32 1.0, %v157
  %v159 = vrcp.pop %v153
  %v160 = vmul.f32 1.0, %v159
  %v161 = vrcp.pop %v154
  %v162 = vmul.f32 1.0, %v161
  %v163 = vld [vmem:[%s2] sm:$0xff]
  %v164 = vld [vmem:[%s2 + $0x8] sm:$0xff]
  %v165 = vld [vmem:[%s2 + $0x10] sm:$0xff]
  %v166 = vld [vmem:[%s2 + $0x18] sm:$0xff]
  %v167 = vld [vmem:[%s5] sm:$0x1]
  %v169 = vlaneseq
  %v170 = vshrl.u32 %v169, 7
  %v171 = vsub.s32 0, %v170
  %v172 = vrot.slane %v167, %v171
  %174 = vmatprep.subr.mxu0 0.0
  %175 = vmatpush1.msra.mxu0 %v163
  %176 = vmatprep.subr.mxu0 0.0
  %177 = vmatpush1.msra.mxu0 %v164
  %178 = vmatprep.subr.mxu0 0.0
  %179 = vmatpush1.msra.mxu0 %v165
  %180 = vmatprep.subr.mxu0 0.0
  %181 = vmatpush1.msra.mxu0 %v166
  %182 = vmatprep.subr.mxu0 0.0
  %183 = vmatpush1.msra.mxu0 0.0
  %184 = vmatprep.subr.mxu0 0.0
  %185 = vmatpush1.msra.mxu0 0.0
  %186 = vmatprep.subr.mxu0 0.0
  %187 = vmatpush1.msra.mxu0 0.0
  %188 = vmatprep.subr.mxu0 0.0
  %189 = vmatpush1.msra.mxu0 0.0
  %190 = vmatprep.subr.mxu0 0.0
  %191 = vmatpush1.msra.mxu0 0.0
  %192 = vmatprep.subr.mxu0 0.0
  %193 = vmatpush1.msra.mxu0 0.0
  %194 = vmatprep.subr.mxu0 0.0
  %195 = vmatpush1.msra.mxu0 0.0
  %196 = vmatprep.subr.mxu0 0.0
  %197 = vmatpush1.msra.mxu0 0.0
  %198 = vmatprep.subr.mxu0 0.0
  %199 = vmatpush1.msra.mxu0 0.0
  %200 = vmatprep.subr.mxu0 0.0
  %201 = vmatpush1.msra.mxu0 0.0
  %202 = vmatprep.subr.mxu0 0.0
  %203 = vmatpush1.msra.mxu0 0.0
  %204 = vmatprep.subr.mxu0 0.0
  %205 = vmatpush1.msra.mxu0 0.0
  %206 = vmatprep.subr.mxu0 0.0
  %207 = vmatpush1.msra.mxu0 0.0
  %208 = vmatprep.subr.mxu0 0.0
  %209 = vmatpush1.msra.mxu0 0.0
  %210 = vmatprep.subr.mxu0 0.0
  %211 = vmatpush1.msra.mxu0 0.0
  %212 = vmatprep.subr.mxu0 0.0
  %213 = vmatpush1.msra.mxu0 0.0
  %214 = vmatprep.subr.mxu0 0.0
  %215 = vmatpush1.msra.mxu0 0.0
  %216 = vmatprep.subr.mxu0 0.0
  %217 = vmatpush1.msra.mxu0 0.0
  %218 = vmatprep.subr.mxu0 0.0
  %219 = vmatpush1.msra.mxu0 0.0
  %220 = vmatprep.subr.mxu0 0.0
  %221 = vmatpush1.msra.mxu0 0.0
  %222 = vmatprep.subr.mxu0 0.0
  %223 = vmatpush1.msra.mxu0 0.0
  %224 = vmatprep.subr.mxu0 0.0
  %225 = vmatpush1.msra.mxu0 0.0
  %226 = vmatprep.subr.mxu0 0.0
  %227 = vmatpush1.msra.mxu0 0.0
  %228 = vmatprep.subr.mxu0 0.0
  %229 = vmatpush1.msra.mxu0 0.0
  %230 = vmatprep.subr.mxu0 0.0
  %231 = vmatpush1.msra.mxu0 0.0
  %232 = vmatprep.subr.mxu0 0.0
  %233 = vmatpush1.msra.mxu0 0.0
  %234 = vmatprep.subr.mxu0 0.0
  %235 = vmatpush1.msra.mxu0 0.0
  %236 = vmatprep.subr.mxu0 0.0
  %237 = vmatpush1.msra.mxu0 0.0
  %238 = vmatprep.mubr.f32.mxu0 0.0
  %239 = vmatmul.mubr.f32.gmra.mrb[0].mxu0 %v43
  %v240 = vpop.f32.mrb[0].mxu0
  %v241 = vadd.f32 %v172, %v240
  %v242 = vpop.f32.mrb[0].mxu0
  %243 = vmatprep.mubr.f32.mxu0 0.0
  %244 = vmatmul.mubr.f32.gmra.mrb[0].mxu0 %v46
  %v245 = vpop.f32.mrb[0].mxu0
  %v246 = vadd.f32 %v172, %v245
  %v247 = vpop.f32.mrb[0].mxu0
  %248 = vmatprep.mubr.f32.mxu0 0.0
  %249 = vmatmul.mubr.f32.gmra.mrb[0].mxu0 %v49
  %v250 = vpop.f32.mrb[0].mxu0
  %v251 = vadd.f32 %v172, %v250
  %v252 = vpop.f32.mrb[0].mxu0
  %253 = vmatprep.mubr.f32.mxu0 0.0
  %254 = vmatmul.mubr.f32.gmra.mrb[0].mxu0 %v52
  %v255 = vpop.f32.mrb[0].mxu0
  %v256 = vadd.f32 %v172, %v255
  %v257 = vpop.f32.mrb[0].mxu0
  %258 = vdwg.mxu0
  %v259 = vtanh.pop %v241
  %v260 = vtanh.pop %v246
  %v261 = vtanh.pop %v251
  %v262 = vtanh.pop %v256
  %v263 = vld [vmem:[%s3] sm:$0xff]
  %v264 = vld [vmem:[%s3 + $0x8] sm:$0xff]
  %v265 = vld [vmem:[%s3 + $0x10] sm:$0xff]
  %v266 = vld [vmem:[%s3 + $0x18] sm:$0xff]
  %v267 = vld [vmem:[%s6] sm:$0x1]
  %v269 = vlaneseq
  %v270 = vshrl.u32 %v269, 7
  %v271 = vsub.s32 0, %v270
  %v272 = vrot.slane %v267, %v271
  %274 = vmatprep.subr.mxu0 0.0
  %275 = vmatpush1.msra.mxu0 %v263
  %276 = vmatprep.subr.mxu0 0.0
  %277 = vmatpush1.msra.mxu0 %v264
  %278 = vmatprep.subr.mxu0 0.0
  %279 = vmatpush1.msra.mxu0 %v265
  %280 = vmatprep.subr.mxu0 0.0
  %281 = vmatpush1.msra.mxu0 %v266
  %282 = vmatprep.subr.mxu0 0.0
  %283 = vmatpush1.msra.mxu0 0.0
  %284 = vmatprep.subr.mxu0 0.0
  %285 = vmatpush1.msra.mxu0 0.0
  %286 = vmatprep.subr.mxu0 0.0
  %287 = vmatpush1.msra.mxu0 0.0
  %288 = vmatprep.subr.mxu0 0.0
  %289 = vmatpush1.msra.mxu0 0.0
  %290 = vmatprep.subr.mxu0 0.0
  %291 = vmatpush1.msra.mxu0 0.0
  %292 = vmatprep.subr.mxu0 0.0
  %293 = vmatpush1.msra.mxu0 0.0
  %294 = vmatprep.subr.mxu0 0.0
  %295 = vmatpush1.msra.mxu0 0.0
  %296 = vmatprep.subr.mxu0 0.0
  %297 = vmatpush1.msra.mxu0 0.0
  %298 = vmatprep.subr.mxu0 0.0
  %299 = vmatpush1.msra.mxu0 0.0
  %300 = vmatprep.subr.mxu0 0.0
  %301 = vmatpush1.msra.mxu0 0.0
  %302 = vmatprep.subr.mxu0 0.0
  %303 = vmatpush1.msra.mxu0 0.0
  %304 = vmatprep.subr.mxu0 0.0
  %305 = vmatpush1.msra.mxu0 0.0
  %306 = vmatprep.subr.mxu0 0.0
  %307 = vmatpush1.msra.mxu0 0.0
  %308 = vmatprep.subr.mxu0 0.0
  %309 = vmatpush1.msra.mxu0 0.0
  %310 = vmatprep.subr.mxu0 0.0
  %311 = vmatpush1.msra.mxu0 0.0
  %312 = vmatprep.subr.mxu0 0.0
  %313 = vmatpush1.msra.mxu0 0.0
  %314 = vmatprep.subr.mxu0 0.0
  %315 = vmatpush1.msra.mxu0 0.0
  %316 = vmatprep.subr.mxu0 0.0
  %317 = vmatpush1.msra.mxu0 0.0
  %318 = vmatprep.subr.mxu0 0.0
  %319 = vmatpush1.msra.mxu0 0.0
  %320 = vmatprep.subr.mxu0 0.0
  %321 = vmatpush1.msra.mxu0 0.0
  %322 = vmatprep.subr.mxu0 0.0
  %323 = vmatpush1.msra.mxu0 0.0
  %324 = vmatprep.subr.mxu0 0.0
  %325 = vmatpush1.msra.mxu0 0.0
  %326 = vmatprep.subr.mxu0 0.0
  %327 = vmatpush1.msra.mxu0 0.0
  %328 = vmatprep.subr.mxu0 0.0
  %329 = vmatpush1.msra.mxu0 0.0
  %330 = vmatprep.subr.mxu0 0.0
  %331 = vmatpush1.msra.mxu0 0.0
  %332 = vmatprep.subr.mxu0 0.0
  %333 = vmatpush1.msra.mxu0 0.0
  %334 = vmatprep.subr.mxu0 0.0
  %335 = vmatpush1.msra.mxu0 0.0
  %336 = vmatprep.subr.mxu0 0.0
  %337 = vmatpush1.msra.mxu0 0.0
  %338 = vmatprep.mubr.f32.mxu0 0.0
  %339 = vmatmul.mubr.f32.gmra.mrb[0].mxu0 %v43
  %v340 = vpop.f32.mrb[0].mxu0
  %v341 = vadd.f32 %v272, %v340
  %v342 = vpop.f32.mrb[0].mxu0
  %343 = vmatprep.mubr.f32.mxu0 0.0
  %344 = vmatmul.mubr.f32.gmra.mrb[0].mxu0 %v46
  %v345 = vpop.f32.mrb[0].mxu0
  %v346 = vadd.f32 %v272, %v345
  %v347 = vpop.f32.mrb[0].mxu0
  %348 = vmatprep.mubr.f32.mxu0 0.0
  %349 = vmatmul.mubr.f32.gmra.mrb[0].mxu0 %v49
  %v350 = vpop.f32.mrb[0].mxu0
  %v351 = vadd.f32 %v272, %v350
  %v352 = vpop.f32.mrb[0].mxu0
  %353 = vmatprep.mubr.f32.mxu0 0.0
  %354 = vmatmul.mubr.f32.gmra.mrb[0].mxu0 %v52
  %v355 = vpop.f32.mrb[0].mxu0
  %v356 = vadd.f32 %v272, %v355
  %v357 = vpop.f32.mrb[0].mxu0
  %358 = vdwg.mxu0
  %v359 = vxor.u32 %v341, 2147483648
  %v360 = vxor.u32 %v346, 2147483648
  %v361 = vxor.u32 %v351, 2147483648
  %v362 = vxor.u32 %v356, 2147483648
  %v363 = vmul.f32 %v359, 1.442695
  %v364 = vpow.pop %v363
  %v365 = vmul.f32 %v360, 1.442695
  %v366 = vpow.pop %v365
  %v367 = vmul.f32 %v361, 1.442695
  %v368 = vpow.pop %v367
  %v369 = vmul.f32 %v362, 1.442695
  %v370 = vpow.pop %v369
  %v371 = vadd.f32 %v364, 1.0
  %v372 = vadd.f32 %v366, 1.0
  %v373 = vadd.f32 %v368, 1.0
  %v374 = vadd.f32 %v370, 1.0
  %v375 = vrcp.pop %v371
  %v376 = vmul.f32 1.0, %v375
  %v377 = vrcp.pop %v372
  %v378 = vmul.f32 1.0, %v377
  %v379 = vrcp.pop %v373
  %v380 = vmul.f32 1.0, %v379
  %v381 = vrcp.pop %v374
  %v382 = vmul.f32 1.0, %v381
  %v383 = vmul.f32 %v156, %v259
  %v384 = vmul.f32 %v158, %v260
  %v385 = vmul.f32 %v160, %v261
  %v386 = vmul.f32 %v162, %v262
  %v387 = vtanh.pop %v383
  %v388 = vtanh.pop %v384
  %v389 = vtanh.pop %v385
  %v390 = vtanh.pop %v386
  %v391 = vmul.f32 %v376, %v387
  %v392 = vmul.f32 %v378, %v388
  %v393 = vmul.f32 %v380, %v389
  %v394 = vmul.f32 %v382, %v390
  %395 = vst.msk [vmem:[%s7] sm:$0xff] %vm41, %v391
  %396 = vst.msk [vmem:[%s7 + $0x8] sm:$0xff] %vm41, %v392
  %397 = vst.msk [vmem:[%s7 + $0x10] sm:$0xff] %vm41, %v393
  %398 = vst.msk [vmem:[%s7 + $0x18] sm:$0xff] %vm41, %v394
  // Predicated region
  $region30: #{evolve_gcno_forward.2} parent=0 // pred_check
    _
  $region31: #{evolve_gcno_forward.2} parent=0 // pred_check_branch
    %400 = sbr.rel (0) target = $region33
  $region32: #{evolve_gcno_forward.2} parent=0 // pred_region
    _
  $region33: #{evolve_gcno_forward.2} parent=0 // pred_fallthru
    _
  // Predicated region
  $region34: #{evolve_gcno_forward.2} parent=0 // pred_check
    _
  $region35: #{evolve_gcno_forward.2} parent=0 // pred_check_branch
    %402 = sbr.rel (0) target = $region37
  $region36: #{evolve_gcno_forward.2} parent=0 // pred_region
    _
  $region37: #{evolve_gcno_forward.2} parent=0 // pred_fallthru
    _

// kernel: evolve_gcno_forward.3
$region0: #{evolve_gcno_forward.3}
  #allocation0 [shape = 'u32[]', space=smem, size = 0x4, offset = 0x4, fixed_abs, tag = 'smem constant byte address 0x4 - core index']
  #allocation1 [shape = 'u32[144,128]{1,0:T(1,128)}', space=vmem, size = 0x12000, scoped, tag = 'internal scratch']
  %s0 = inlined_call_operand.vmem [shape: bf16[304,384], index: 0, kind: input, shape index: {}]
  %s1 = inlined_call_operand.vmem [shape: bf16[384,32], index: 1, kind: input, shape index: {}]
  %s2 = inlined_call_operand.vmem [shape: bf16[32,32], index: 2, kind: input, shape index: {}]
  %s3 = inlined_call_operand.vmem [shape: f32[304,32], index: 3, kind: output, shape index: {}]
  %s4 = sld [smem:[#allocation0]]
  $region49: #{evolve_gcno_forward.3} parent=0
    _
  %s6 = ssub.s32 1, %s4
  %s7 = scalar_select 0, %s6, %s4
  loop: start=0, step=1, limit=4
  $region2: #{evolve_gcno_forward.3} parent=0 // loop_pre_header
    _
  $region3: #{evolve_gcno_forward.3} parent=0 // loop_header
    %s9 = sphi 0, %s13
    %p10 = scmp.ge.s32.totalorder %s9, 4
    %s16 = sphi 0, %s28
    %s17 = sphi 0, %s24
    %s18 = sphi 0, %s16
    %s19 = sphi 0, %s17
    %s20 = sphi 0, %s18
    %s21 = sphi 0, %s19
    %s33 = sphi 0, %s35
    %s36 = sphi 0, %s33
    %s37 = sphi 0, %s36
    %s53 = sphi 0, %s37
    %s57 = sphi 0, %s57
    %s59 = sphi 0, %s57
    %s60 = sphi 0, %s59
    %s74 = sphi 0, %s60
    %s78 = sphi 0, %s78
    %s80 = sphi 0, %s78
    %s81 = sphi 0, %s80
    %s95 = sphi 0, %s81
    %s101 = sphi 0, %s103
    %s104 = sphi 0, %s101
    %s105 = sphi 0, %s104
    %s121 = sphi 0, %s105
  $region4: #{evolve_gcno_forward.3} parent=0 // loop_header_branch
    %12 = sbr.rel (%p10) target = $region8
  $region5: #{evolve_gcno_forward.3} parent=0 // loop_body
    %s14 = ssub.s32 %s9, 1
    %s15 = ssub.s32 %s9, 2
    %s22 = sadd.s32 1, %s17
    %p23 = scmp.ge.s32.totalorder %s22, 1
    %s24 = scalar_select %p23, 0, %s22
    %s25 = sadd.s32 1, %s16
    %s26 = scalar_select %p23, %s25, %s16
    %p27 = scmp.ge.s32.totalorder %s26, 2
    %s28 = scalar_select %p27, 0, %s26
    %s29 = ssub.s32 %s16, %s28
    %s30 = ssub.s32 %s17, %s24
    %s31 = sor.u32 %s29, %s30
    %p32 = scmp.eq.s32.totalorder %s31, 0
    %s34 = sadd.s32 %s33, 1
    %s35 = scalar_select %p32, %s33, %s34
    %p38 = pneg %p32
    %p39 = scmp.eq.s32.totalorder %s9, 1
    %p40 = por %p38, %p39
    %p41 = scmp.ne.s32.totalorder %s33, %s36
    %p42 = scmp.eq.s32.totalorder %s9, 0
    %p43 = por %p41, %p42
    %p44 = scmp.ne.s32.totalorder %s33, %s36
    %p45 = scmp.eq.s32.totalorder %s14, 1
    %p46 = por %p44, %p45
    %p47 = scmp.ne.s32.totalorder %s36, %s37
    %p48 = scmp.eq.s32.totalorder %s14, 0
    %p49 = por %p47, %p48
    %p50 = scmp.ne.s32.totalorder %s36, %s37
    %p51 = scmp.eq.s32.totalorder %s15, 1
    %p52 = por %p50, %p51
    %p54 = scmp.ne.s32.totalorder %s37, %s53
    %p55 = scmp.eq.s32.totalorder %s15, 0
    %p56 = por %p54, %p55
    %s58 = sadd.s32 %s57, 1
    %p61 = scmp.eq.s32.totalorder %s9, 1
    %p62 = scmp.ne.s32.totalorder %s57, %s59
    %p63 = scmp.eq.s32.totalorder %s9, 0
    %p64 = por %p62, %p63
    %p65 = scmp.ne.s32.totalorder %s57, %s59
    %p66 = scmp.eq.s32.totalorder %s14, 1
    %p67 = por %p65, %p66
    %p68 = scmp.ne.s32.totalorder %s59, %s60
    %p69 = scmp.eq.s32.totalorder %s14, 0
    %p70 = por %p68, %p69
    %p71 = scmp.ne.s32.totalorder %s59, %s60
    %p72 = scmp.eq.s32.totalorder %s15, 1
    %p73 = por %p71, %p72
    %p75 = scmp.ne.s32.totalorder %s60, %s74
    %p76 = scmp.eq.s32.totalorder %s15, 0
    %p77 = por %p75, %p76
    %s79 = sadd.s32 %s78, 1
    %p82 = scmp.eq.s32.totalorder %s9, 1
    %p83 = scmp.ne.s32.totalorder %s78, %s80
    %p84 = scmp.eq.s32.totalorder %s9, 0
    %p85 = por %p83, %p84
    %p86 = scmp.ne.s32.totalorder %s78, %s80
    %p87 = scmp.eq.s32.totalorder %s14, 1
    %p88 = por %p86, %p87
    %p89 = scmp.ne.s32.totalorder %s80, %s81
    %p90 = scmp.eq.s32.totalorder %s14, 0
    %p91 = por %p89, %p90
    %p92 = scmp.ne.s32.totalorder %s80, %s81
    %p93 = scmp.eq.s32.totalorder %s15, 1
    %p94 = por %p92, %p93
    %p96 = scmp.ne.s32.totalorder %s81, %s95
    %p97 = scmp.eq.s32.totalorder %s15, 0
    %p98 = por %p96, %p97
    %s99 = ssub.s32 %s16, %s28
    %p100 = scmp.eq.s32.totalorder %s99, 0
    %s102 = sadd.s32 %s101, 1
    %s103 = scalar_select %p100, %s101, %s102
    %p106 = pneg %p100
    %p107 = scmp.eq.s32.totalorder %s9, 1
    %p108 = por %p106, %p107
    %p109 = scmp.ne.s32.totalorder %s101, %s104
    %p110 = scmp.eq.s32.totalorder %s9, 0
    %p111 = por %p109, %p110
    %p112 = scmp.ne.s32.totalorder %s101, %s104
    %p113 = scmp.eq.s32.totalorder %s14, 1
    %p114 = por %p112, %p113
    %p115 = scmp.ne.s32.totalorder %s104, %s105
    %p116 = scmp.eq.s32.totalorder %s14, 0
    %p117 = por %p115, %p116
    %p118 = scmp.ne.s32.totalorder %s104, %s105
    %p119 = scmp.eq.s32.totalorder %s15, 1
    %p120 = por %p118, %p119
    %p122 = scmp.ne.s32.totalorder %s105, %s121
    %p123 = scmp.eq.s32.totalorder %s15, 0
    %p124 = por %p122, %p123
    %p125 = scmp.le.s32.totalorder 1, %s9
    %p126 = scmp.lt.s32.totalorder %s9, 3
    %p127 = pnand %p125, %p126
    %p128 = pneg %p127
    // Predicated region
    $region9: #{evolve_gcno_forward.3} parent=5 // pred_check
      _
    $region10: #{evolve_gcno_forward.3} parent=5 // pred_check_branch
      %130 = sbr.rel (%p127) target = $region12
    $region11: #{evolve_gcno_forward.3} parent=5 // pred_region
      %s131 = ssub.s32 %s9, 1
      // Predicated region
      $region13: #{evolve_gcno_forward.3} parent=11 // pred_check
        %p132 = pneg %p70
      $region14: #{evolve_gcno_forward.3} parent=11 // pred_check_branch
        %134 = sbr.rel (%p132) target = $region16
      $region15: #{evolve_gcno_forward.3} parent=11 // pred_region
        _
      $region16: #{evolve_gcno_forward.3} parent=11 // pred_fallthru
        _
      // Predicated region
      $region17: #{evolve_gcno_forward.3} parent=11 // pred_check
        %p135 = pneg %p91
      $region18: #{evolve_gcno_forward.3} parent=11 // pred_check_branch
        %137 = sbr.rel (%p135) target = $region20
      $region19: #{evolve_gcno_forward.3} parent=11 // pred_region
        _
      $region20: #{evolve_gcno_forward.3} parent=11 // pred_fallthru
        _
    $region12: #{evolve_gcno_forward.3} parent=5 // pred_fallthru
      _
    %p138 = scmp.lt.s32.totalorder %s9, 2
    // Predicated region
    $region21: #{evolve_gcno_forward.3} parent=5 // pred_check
      %p139 = pneg %p138
    $region22: #{evolve_gcno_forward.3} parent=5 // pred_check_branch
      %141 = sbr.rel (%p139) target = $region24
    $region23: #{evolve_gcno_forward.3} parent=5 // pred_region
      // Predicated region
      $region25: #{evolve_gcno_forward.3} parent=23 // pred_check
        %p142 = pneg %p43
      $region26: #{evolve_gcno_forward.3} parent=23 // pred_check_branch
        %144 = sbr.rel (%p142) target = $region28
      $region27: #{evolve_gcno_forward.3} parent=23 // pred_region
        %s145 = smul.u32 19, %s16
        %s146 = smul.u32 3, %s17
        %p147 = scmp.lt.s32.totalorder %s145, 37
        %s148 = scalar_select %p147, %s145, 37
        %p149 = scmp.lt.s32.totalorder %s146, 2
        %s150 = scalar_select %p149, %s146, 2
        %s151 = smul.addr %s148, 3
        %s152 = sadd.s32 %s150, %s151
        %s153 = smul.addr %s152, 4
        %s154 = scalar_lea.vmem %s0, %s153
        %s155 = smul.u32 19, %s16
        %s156 = smul.u32 3, %s17
      $region28: #{evolve_gcno_forward.3} parent=23 // pred_fallthru
        _
    $region24: #{evolve_gcno_forward.3} parent=5 // pred_fallthru
      _
    %p157 = scmp.le.s32.totalorder 1, %s9
    %p158 = scmp.lt.s32.totalorder %s9, 3
    %p159 = pnand %p157, %p158
    %p160 = pneg %p159
    // Predicated region
    $region29: #{evolve_gcno_forward.3} parent=5 // pred_check
      _
    $region30: #{evolve_gcno_forward.3} parent=5 // pred_check_branch
      %162 = sbr.rel (%p159) target = $region32
    $region31: #{evolve_gcno_forward.3} parent=5 // pred_region
      %s163 = ssub.s32 %s9, 1
      %s164 = smul.u32 19, %s18
      %s165 = smul.u32 3, %s19
      %p166 = scmp.lt.s32.totalorder %s164, 37
      %s167 = scalar_select %p166, %s164, 37
      %p168 = scmp.lt.s32.totalorder %s165, 2
      %s169 = scalar_select %p168, %s165, 2
      %s170 = smul.addr %s167, 3
      %s171 = sadd.s32 %s169, %s170
      %s172 = smul.addr %s171, 4
      %s173 = scalar_lea.vmem %s0, %s172
      %p174 = pneg %p49
      %p175 = pneg %p46
      %p176 = pneg %p70
      %p177 = pneg %p67
      %p178 = pneg %p91
      %p179 = pneg %p88
      %p180 = pneg %p117
      %p181 = pneg %p114
      %s182 = smul.u32 19, %s18
      %p183 = scmp.lt.s32.totalorder %s182, 37
      %s184 = scalar_select %p183, %s182, 37
      %s185 = smul.addr %s184, 8
      %s186 = scalar_lea.vmem %s3, %s185
      %s187 = smul.u32 19, %s18
      %s188 = smul.u32 3, %s19
      %p189 = scmp.lt.s32.totalorder %s187, 37
      %s190 = scalar_select %p189, %s187, 37
      %p191 = scmp.lt.s32.totalorder %s188, 2
      %s192 = scalar_select %p191, %s188, 2
      %s193 = smul.addr %s190, 3
      %s194 = sadd.s32 %s192, %s193
      %s195 = smul.addr %s194, 4
      %s196 = scalar_lea.vmem %s0, %s195
      %s197 = smul.u32 19, %s18
      %s198 = smul.u32 3, %s19
      %s199 = smul.u32 19, %s18
      %p200 = scmp.lt.s32.totalorder %s199, 37
      %s201 = scalar_select %p200, %s199, 37
      %s202 = smul.addr %s201, 8
      %s203 = scalar_lea.vmem %s3, %s202
      %s204 = smul.u32 19, %s18
      %p206 = scmp.eq.s32.totalorder %s19, 0
      // Predicated region
      $region33: #{evolve_gcno_forward.3} parent=31 // pred_check
        %p207 = pneg %p206
      $region34: #{evolve_gcno_forward.3} parent=31 // pred_check_branch
        %209 = sbr.rel (%p207) target = $region36
      $region35: #{evolve_gcno_forward.3} parent=31 // pred_region
        %vm210 = vcmask 261120
        %211 = vst.msk [vmem:[%s203] sm:$0xff] %vm210, 0.0
        %212 = vst.msk [vmem:[%s203 + $0x8] sm:$0xff] %vm210, 0.0
        %213 = vst.msk [vmem:[%s203 + $0x10] sm:$0xff] %vm210, 0.0
        %214 = vst.msk [vmem:[%s203 + $0x18] sm:$0xff] %vm210, 0.0
        %215 = vst.msk [vmem:[%s203 + $0x20] sm:$0xff] %vm210, 0.0
        %216 = vst.msk [vmem:[%s203 + $0x28] sm:$0xff] %vm210, 0.0
        %217 = vst.msk [vmem:[%s203 + $0x30] sm:$0xff] %vm210, 0.0
        %218 = vst.msk [vmem:[%s203 + $0x38] sm:$0xff] %vm210, 0.0
        %219 = vst.msk [vmem:[%s203 + $0x40] sm:$0xff] %vm210, 0.0
        %220 = vst.msk [vmem:[%s203 + $0x48] sm:$0xff] %vm210, 0.0
        %221 = vst.msk [vmem:[%s203 + $0x50] sm:$0xff] %vm210, 0.0
        %222 = vst.msk [vmem:[%s203 + $0x58] sm:$0xff] %vm210, 0.0
        %223 = vst.msk [vmem:[%s203 + $0x60] sm:$0xff] %vm210, 0.0
        %224 = vst.msk [vmem:[%s203 + $0x68] sm:$0xff] %vm210, 0.0
        %225 = vst.msk [vmem:[%s203 + $0x70] sm:$0xff] %vm210, 0.0
        %226 = vst.msk [vmem:[%s203 + $0x78] sm:$0xff] %vm210, 0.0
        %227 = vst.msk [vmem:[%s203 + $0x80] sm:$0xff] %vm210, 0.0
        %228 = vst.msk [vmem:[%s203 + $0x88] sm:$0xff] %vm210, 0.0
        %229 = vst.msk [vmem:[%s203 + $0x90] sm:$0xff] %vm210, 0.0
      $region36: #{evolve_gcno_forward.3} parent=31 // pred_fallthru
        _
      %s230 = smul.u32 %s19, 384
      %s231 = sshra.s32 %s230, 3
      %s232 = sand.u32 %s230, 7
      %s233 = smul.addr %s231, 4
      %s234 = scalar_lea.vmem %s1, %s233
      %v235 = vld [vmem:[%s234] sm:$0xf]
      %v236 = vld [vmem:[%s234 + $0x4] sm:$0xf]
      %v237 = vld [vmem:[%s234 + $0x8] sm:$0xf]
      %v238 = vld [vmem:[%s234 + $0xc] sm:$0xf]
      %v239 = vld [vmem:[%s234 + $0x10] sm:$0xf]
      %v240 = vld [vmem:[%s234 + $0x14] sm:$0xf]
      %v241 = vld [vmem:[%s234 + $0x18] sm:$0xf]
      %v242 = vld [vmem:[%s234 + $0x1c] sm:$0xf]
      %v243 = vld [vmem:[%s234 + $0x20] sm:$0xf]
      %v244 = vld [vmem:[%s234 + $0x24] sm:$0xf]
      %v245 = vld [vmem:[%s234 + $0x28] sm:$0xf]
      %v246 = vld [vmem:[%s234 + $0x2c] sm:$0xf]
      %v247 = vld [vmem:[%s234 + $0x30] sm:$0xf]
      %v248 = vld [vmem:[%s234 + $0x34] sm:$0xf]
      %v249 = vld [vmem:[%s234 + $0x38] sm:$0xf]
      %v250 = vld [vmem:[%s234 + $0x3c] sm:$0xf]
      %v251 = vld [vmem:[%s234 + $0x40] sm:$0xf]
      %v252 = vld [vmem:[%s234 + $0x44] sm:$0xf]
      %v253 = vld [vmem:[%s234 + $0x48] sm:$0xf]
      %v254 = vld [vmem:[%s234 + $0x4c] sm:$0xf]
      %v255 = vld [vmem:[%s234 + $0x50] sm:$0xf]
      %v256 = vld [vmem:[%s234 + $0x54] sm:$0xf]
      %v257 = vld [vmem:[%s234 + $0x58] sm:$0xf]
      %v258 = vld [vmem:[%s234 + $0x5c] sm:$0xf]
      %v259 = vld [vmem:[%s234 + $0x60] sm:$0xf]
      %v260 = vld [vmem:[%s234 + $0x64] sm:$0xf]
      %v261 = vld [vmem:[%s234 + $0x68] sm:$0xf]
      %v262 = vld [vmem:[%s234 + $0x6c] sm:$0xf]
      %v263 = vld [vmem:[%s234 + $0x70] sm:$0xf]
      %v264 = vld [vmem:[%s234 + $0x74] sm:$0xf]
      %v265 = vld [vmem:[%s234 + $0x78] sm:$0xf]
      %v266 = vld [vmem:[%s234 + $0x7c] sm:$0xf]
      %v267 = vld [vmem:[%s234 + $0x80] sm:$0xf]
      %v268 = vld [vmem:[%s234 + $0x84] sm:$0xf]
      %v269 = vld [vmem:[%s234 + $0x88] sm:$0xf]
      %v270 = vld [vmem:[%s234 + $0x8c] sm:$0xf]
      %v271 = vld [vmem:[%s234 + $0x90] sm:$0xf]
      %v272 = vld [vmem:[%s234 + $0x94] sm:$0xf]
      %v273 = vld [vmem:[%s234 + $0x98] sm:$0xf]
      %v274 = vld [vmem:[%s234 + $0x9c] sm:$0xf]
      %v275 = vld [vmem:[%s234 + $0xa0] sm:$0xf]
      %v276 = vld [vmem:[%s234 + $0xa4] sm:$0xf]
      %v277 = vld [vmem:[%s234 + $0xa8] sm:$0xf]
      %v278 = vld [vmem:[%s234 + $0xac] sm:$0xf]
      %v279 = vld [vmem:[%s234 + $0xb0] sm:$0xf]
      %v280 = vld [vmem:[%s234 + $0xb4] sm:$0xf]
      %v281 = vld [vmem:[%s234 + $0xb8] sm:$0xf]
      %v282 = vld [vmem:[%s234 + $0xbc] sm:$0xf]
      %v283 = vld [vmem:[%s2] sm:$0xf]
      %v284 = vld [vmem:[%s2 + $0x4] sm:$0xf]
      %v285 = vld [vmem:[%s2 + $0x8] sm:$0xf]
      %v286 = vld [vmem:[%s2 + $0xc] sm:$0xf]
      %v335 = vunpack.c.l.b16 %v235
      %v336 = vunpack.c.l.b16 %v236
      %v337 = vunpack.c.l.b16 %v237
      %v338 = vunpack.c.l.b16 %v238
      %v339 = vunpack.c.l.b16 %v239
      %v340 = vunpack.c.l.b16 %v240
      %v341 = vunpack.c.l.b16 %v241
      %v342 = vunpack.c.l.b16 %v242
      %v343 = vunpack.c.l.b16 %v243
      %v344 = vunpack.c.l.b16 %v244
      %v345 = vunpack.c.l.b16 %v245
      %v346 = vunpack.c.l.b16 %v246
      %v347 = vunpack.c.l.b16 %v247
      %v348 = vunpack.c.l.b16 %v248
      %v349 = vunpack.c.l.b16 %v249
      %v350 = vunpack.c.l.b16 %v250
      %v351 = vunpack.c.l.b16 %v251
      %v352 = vunpack.c.l.b16 %v252
      %v353 = vunpack.c.l.b16 %v253
      %v354 = vunpack.c.l.b16 %v254
      %v355 = vunpack.c.l.b16 %v255
      %v356 = vunpack.c.l.b16 %v256
      %v357 = vunpack.c.l.b16 %v257
      %v358 = vunpack.c.l.b16 %v258
      %v359 = vunpack.c.l.b16 %v259
      %v360 = vunpack.c.l.b16 %v260
      %v361 = vunpack.c.l.b16 %v261
      %v362 = vunpack.c.l.b16 %v262
      %v363 = vunpack.c.l.b16 %v263
      %v364 = vunpack.c.l.b16 %v264
      %v365 = vunpack.c.l.b16 %v265
      %v366 = vunpack.c.l.b16 %v266
      %v367 = vunpack.c.l.b16 %v267
      %v368 = vunpack.c.l.b16 %v268
      %v369 = vunpack.c.l.b16 %v269
      %v370 = vunpack.c.l.b16 %v270
      %v371 = vunpack.c.l.b16 %v271
      %v372 = vunpack.c.l.b16 %v272
      %v373 = vunpack.c.l.b16 %v273
      %v374 = vunpack.c.l.b16 %v274
      %v375 = vunpack.c.l.b16 %v275
      %v376 = vunpack.c.l.b16 %v276
      %v377 = vunpack.c.l.b16 %v277
      %v378 = vunpack.c.l.b16 %v278
      %v379 = vunpack.c.l.b16 %v279
      %v380 = vunpack.c.l.b16 %v280
      %v381 = vunpack.c.l.b16 %v281
      %v382 = vunpack.c.l.b16 %v282
      %v383 = vpack.c.b16 %v336, %v335
      %v384 = vpack.c.b16 %v338, %v337
      %v385 = vpack.c.b16 %v340, %v339
      %v386 = vpack.c.b16 %v342, %v341
      %v387 = vpack.c.b16 %v344, %v343
      %v388 = vpack.c.b16 %v346, %v345
      %v389 = vpack.c.b16 %v348, %v347
      %v390 = vpack.c.b16 %v350, %v349
      %v391 = vpack.c.b16 %v352, %v351
      %v392 = vpack.c.b16 %v354, %v353
      %v393 = vpack.c.b16 %v356, %v355
      %v394 = vpack.c.b16 %v358, %v357
      %v395 = vpack.c.b16 %v360, %v359
      %v396 = vpack.c.b16 %v362, %v361
      %v397 = vpack.c.b16 %v364, %v363
      %v398 = vpack.c.b16 %v366, %v365
      %v399 = vpack.c.b16 %v368, %v367
      %v400 = vpack.c.b16 %v370, %v369
      %v401 = vpack.c.b16 %v372, %v371
      %v402 = vpack.c.b16 %v374, %v373
      %v403 = vpack.c.b16 %v376, %v375
      %v404 = vpack.c.b16 %v378, %v377
      %v405 = vpack.c.b16 %v380, %v379
      %v406 = vpack.c.b16 %v382, %v381
      %v411 = vunpack.c.l.b16 %v283
      %v412 = vunpack.c.l.b16 %v284
      %v413 = vunpack.c.l.b16 %v285
      %v414 = vunpack.c.l.b16 %v286
      %v415 = vpack.c.b16 %v412, %v411
      %v416 = vpack.c.b16 %v414, %v413
      %vm419 = vcmask 261120
      %v421 = vsel %vm419, %v383, 0
      %v424 = vsel %vm419, %v384, 0
      %v427 = vsel %vm419, %v385, 0
      %v430 = vsel %vm419, %v386, 0
      %v433 = vsel %vm419, %v387, 0
      %v436 = vsel %vm419, %v388, 0
      %v439 = vsel %vm419, %v389, 0
      %v442 = vsel %vm419, %v390, 0
      %v445 = vsel %vm419, %v391, 0
      %v448 = vsel %vm419, %v392, 0
      %v451 = vsel %vm419, %v393, 0
      %v454 = vsel %vm419, %v394, 0
      %v457 = vsel %vm419, %v395, 0
      %v460 = vsel %vm419, %v396, 0
      %v463 = vsel %vm419, %v397, 0
      %v466 = vsel %vm419, %v398, 0
      %v469 = vsel %vm419, %v399, 0
      %v472 = vsel %vm419, %v400, 0
      %v475 = vsel %vm419, %v401, 0
      %v478 = vsel %vm419, %v402, 0
      %v481 = vsel %vm419, %v403, 0
      %v484 = vsel %vm419, %v404, 0
      %v487 = vsel %vm419, %v405, 0
      %v490 = vsel %vm419, %v406, 0
      %492 = vmatprep.subr.bf16.mxu0 0
      %493 = vmatpush1.bf16.msra.mxu0 %v415
      %494 = vmatprep.subr.bf16.mxu0 0
      %495 = vmatpush1.bf16.msra.mxu0 %v416
      %496 = vmatprep.subr.bf16.mxu0 0
      %497 = vmatpush1.bf16.msra.mxu0 0
      %498 = vmatprep.subr.bf16.mxu0 0
      %499 = vmatpush1.bf16.msra.mxu0 0
      %500 = vmatprep.subr.bf16.mxu0 0
      %501 = vmatpush1.bf16.msra.mxu0 0
      %502 = vmatprep.subr.bf16.mxu0 0
      %503 = vmatpush1.bf16.msra.mxu0 0
      %504 = vmatprep.subr.bf16.mxu0 0
      %505 = vmatpush1.bf16.msra.mxu0 0
      %506 = vmatprep.subr.bf16.mxu0 0
      %507 = vmatpush1.bf16.msra.mxu0 0
      %508 = vmatprep.subr.bf16.mxu0 0
      %509 = vmatpush1.bf16.msra.mxu0 0
      %510 = vmatprep.subr.bf16.mxu0 0
      %511 = vmatpush1.bf16.msra.mxu0 0
      %512 = vmatprep.subr.bf16.mxu0 0
      %513 = vmatpush1.bf16.msra.mxu0 0
      %514 = vmatprep.subr.bf16.mxu0 0
      %515 = vmatpush1.bf16.msra.mxu0 0
      %516 = vmatprep.subr.bf16.mxu0 0
      %517 = vmatpush1.bf16.msra.mxu0 0
      %518 = vmatprep.subr.bf16.mxu0 0
      %519 = vmatpush1.bf16.msra.mxu0 0
      %520 = vmatprep.subr.bf16.mxu0 0
      %521 = vmatpush1.bf16.msra.mxu0 0
      %522 = vmatprep.subr.bf16.mxu0 0
      %523 = vmatpush1.bf16.msra.mxu0 0
      %524 = vmatprep.mubr.bf16.mxu0 0
      %525 = vmatmul.mubr.bf16.gmra.mrb[0].mxu0 %v421
      %v526 = vpop.f32.mrb[0].mxu0
      %v527 = vadd.f32 0.0, %v526
      %v528 = vpop.f32.mrb[0].mxu0
      %v529 = vpop.f32.mrb[0].mxu0
      %v530 = vadd.f32 0.0, %v529
      %v531 = vpop.f32.mrb[0].mxu0
      %532 = vmatprep.mubr.bf16.mxu0 0
      %533 = vmatmul.mubr.bf16.gmra.mrb[0].mxu0 %v424
      %v534 = vpop.f32.mrb[0].mxu0
      %v535 = vadd.f32 0.0, %v534
      %v536 = vpop.f32.mrb[0].mxu0
      %v537 = vpop.f32.mrb[0].mxu0
      %v538 = vadd.f32 0.0, %v537
      %v539 = vpop.f32.mrb[0].mxu0
      %540 = vmatprep.mubr.bf16.mxu0 0
      %541 = vmatmul.mubr.bf16.gmra.mrb[0].mxu0 %v427
      %v542 = vpop.f32.mrb[0].mxu0
      %v543 = vadd.f32 0.0, %v542
      %v544 = vpop.f32.mrb[0].mxu0
      %v545 = vpop.f32.mrb[0].mxu0
      %v546 = vadd.f32 0.0, %v545
      %v547 = vpop.f32.mrb[0].mxu0
      %548 = vmatprep.mubr.bf16.mxu0 0
      %549 = vmatmul.mubr.bf16.gmra.mrb[0].mxu0 %v430
      %v550 = vpop.f32.mrb[0].mxu0
      %v551 = vadd.f32 0.0, %v550
      %v552 = vpop.f32.mrb[0].mxu0
      %v553 = vpop.f32.mrb[0].mxu0
      %v554 = vadd.f32 0.0, %v553
      %v555 = vpop.f32.mrb[0].mxu0
      %556 = vmatprep.mubr.bf16.mxu0 0
      %557 = vmatmul.mubr.bf16.gmra.mrb[0].mxu0 %v433
      %v558 = vpop.f32.mrb[0].mxu0
      %v559 = vadd.f32 0.0, %v558
      %v560 = vpop.f32.mrb[0].mxu0
      %v561 = vpop.f32.mrb[0].mxu0
      %v562 = vadd.f32 0.0, %v561
      %v563 = vpop.f32.mrb[0].mxu0
      %564 = vmatprep.mubr.bf16.mxu0 0
      %565 = vmatmul.mubr.bf16.gmra.mrb[0].mxu0 %v436
      %v566 = vpop.f32.mrb[0].mxu0
      %v567 = vadd.f32 0.0, %v566
      %v568 = vpop.f32.mrb[0].mxu0
      %v569 = vpop.f32.mrb[0].mxu0
      %v570 = vadd.f32 0.0, %v569
      %v571 = vpop.f32.mrb[0].mxu0
      %572 = vmatprep.mubr.bf16.mxu0 0
      %573 = vmatmul.mubr.bf16.gmra.mrb[0].mxu0 %v439
      %v574 = vpop.f32.mrb[0].mxu0
      %v575 = vadd.f32 0.0, %v574
      %v576 = vpop.f32.mrb[0].mxu0
      %v577 = vpop.f32.mrb[0].mxu0
      %v578 = vadd.f32 0.0, %v577
      %v579 = vpop.f32.mrb[0].mxu0
      %580 = vmatprep.mubr.bf16.mxu0 0
      %581 = vmatmul.mubr.bf16.gmra.mrb[0].mxu0 %v442
      %v582 = vpop.f32.mrb[0].mxu0
      %v583 = vadd.f32 0.0, %v582
      %v584 = vpop.f32.mrb[0].mxu0
      %v585 = vpop.f32.mrb[0].mxu0
      %v586 = vadd.f32 0.0, %v585
      %v587 = vpop.f32.mrb[0].mxu0
      %588 = vmatprep.mubr.bf16.mxu0 0
      %589 = vmatmul.mubr.bf16.gmra.mrb[0].mxu0 %v445
      %v590 = vpop.f32.mrb[0].mxu0
      %v591 = vadd.f32 0.0, %v590
      %v592 = vpop.f32.mrb[0].mxu0
      %v593 = vpop.f32.mrb[0].mxu0
      %v594 = vadd.f32 0.0, %v593
      %v595 = vpop.f32.mrb[0].mxu0
      %596 = vmatprep.mubr.bf16.mxu0 0
      %597 = vmatmul.mubr.bf16.gmra.mrb[0].mxu0 %v448
      %v598 = vpop.f32.mrb[0].mxu0
      %v599 = vadd.f32 0.0, %v598
      %v600 = vpop.f32.mrb[0].mxu0
      %v601 = vpop.f32.mrb[0].mxu0
      %v602 = vadd.f32 0.0, %v601
      %v603 = vpop.f32.mrb[0].mxu0
      %604 = vmatprep.mubr.bf16.mxu0 0
      %605 = vmatmul.mubr.bf16.gmra.mrb[0].mxu0 %v451
      %v606 = vpop.f32.mrb[0].mxu0
      %v607 = vadd.f32 0.0, %v606
      %v608 = vpop.f32.mrb[0].mxu0
      %v609 = vpop.f32.mrb[0].mxu0
      %v610 = vadd.f32 0.0, %v609
      %v611 = vpop.f32.mrb[0].mxu0
      %612 = vmatprep.mubr.bf16.mxu0 0
      %613 = vmatmul.mubr.bf16.gmra.mrb[0].mxu0 %v454
      %v614 = vpop.f32.mrb[0].mxu0
      %v615 = vadd.f32 0.0, %v614
      %v616 = vpop.f32.mrb[0].mxu0
      %v617 = vpop.f32.mrb[0].mxu0
      %v618 = vadd.f32 0.0, %v617
      %v619 = vpop.f32.mrb[0].mxu0
      %620 = vmatprep.mubr.bf16.mxu0 0
      %621 = vmatmul.mubr.bf16.gmra.mrb[0].mxu0 %v457
      %v622 = vpop.f32.mrb[0].mxu0
      %v623 = vadd.f32 0.0, %v622
      %v624 = vpop.f32.mrb[0].mxu0
      %v625 = vpop.f32.mrb[0].mxu0
      %v626 = vadd.f32 0.0, %v625
      %v627 = vpop.f32.mrb[0].mxu0
      %628 = vmatprep.mubr.bf16.mxu0 0
      %629 = vmatmul.mubr.bf16.gmra.mrb[0].mxu0 %v460
      %v630 = vpop.f32.mrb[0].mxu0
      %v631 = vadd.f32 0.0, %v630
      %v632 = vpop.f32.mrb[0].mxu0
      %v633 = vpop.f32.mrb[0].mxu0
      %v634 = vadd.f32 0.0, %v633
      %v635 = vpop.f32.mrb[0].mxu0
      %636 = vmatprep.mubr.bf16.mxu0 0
      %637 = vmatmul.mubr.bf16.gmra.mrb[0].mxu0 %v463
      %v638 = vpop.f32.mrb[0].mxu0
      %v639 = vadd.f32 0.0, %v638
      %v640 = vpop.f32.mrb[0].mxu0
      %v641 = vpop.f32.mrb[0].mxu0
      %v642 = vadd.f32 0.0, %v641
      %v643 = vpop.f32.mrb[0].mxu0
      %644 = vmatprep.mubr.bf16.mxu0 0
      %645 = vmatmul.mubr.bf16.gmra.mrb[0].mxu0 %v466
      %v646 = vpop.f32.mrb[0].mxu0
      %v647 = vadd.f32 0.0, %v646
      %v648 = vpop.f32.mrb[0].mxu0
      %v649 = vpop.f32.mrb[0].mxu0
      %v650 = vadd.f32 0.0, %v649
      %v651 = vpop.f32.mrb[0].mxu0
      %652 = vmatprep.mubr.bf16.mxu0 0
      %653 = vmatmul.mubr.bf16.gmra.mrb[0].mxu0 %v469
      %v654 = vpop.f32.mrb[0].mxu0
      %v655 = vadd.f32 0.0, %v654
      %v656 = vpop.f32.mrb[0].mxu0
      %v657 = vpop.f32.mrb[0].mxu0
      %v658 = vadd.f32 0.0, %v657
      %v659 = vpop.f32.mrb[0].mxu0
      %660 = vmatprep.mubr.bf16.mxu0 0
      %661 = vmatmul.mubr.bf16.gmra.mrb[0].mxu0 %v472
      %v662 = vpop.f32.mrb[0].mxu0
      %v663 = vadd.f32 0.0, %v662
      %v664 = vpop.f32.mrb[0].mxu0
      %v665 = vpop.f32.mrb[0].mxu0
      %v666 = vadd.f32 0.0, %v665
      %v667 = vpop.f32.mrb[0].mxu0
      %668 = vmatprep.mubr.bf16.mxu0 0
      %669 = vmatmul.mubr.bf16.gmra.mrb[0].mxu0 %v475
      %v670 = vpop.f32.mrb[0].mxu0
      %v671 = vadd.f32 0.0, %v670
      %v672 = vpop.f32.mrb[0].mxu0
      %v673 = vpop.f32.mrb[0].mxu0
      %v674 = vadd.f32 0.0, %v673
      %v675 = vpop.f32.mrb[0].mxu0
      %676 = vmatprep.mubr.bf16.mxu0 0
      %677 = vmatmul.mubr.bf16.gmra.mrb[0].mxu0 %v478
      %v678 = vpop.f32.mrb[0].mxu0
      %v679 = vadd.f32 0.0, %v678
      %v680 = vpop.f32.mrb[0].mxu0
      %v681 = vpop.f32.mrb[0].mxu0
      %v682 = vadd.f32 0.0, %v681
      %v683 = vpop.f32.mrb[0].mxu0
      %684 = vmatprep.mubr.bf16.mxu0 0
      %685 = vmatmul.mubr.bf16.gmra.mrb[0].mxu0 %v481
      %v686 = vpop.f32.mrb[0].mxu0
      %v687 = vadd.f32 0.0, %v686
      %v688 = vpop.f32.mrb[0].mxu0
      %v689 = vpop.f32.mrb[0].mxu0
      %v690 = vadd.f32 0.0, %v689
      %v691 = vpop.f32.mrb[0].mxu0
      %692 = vmatprep.mubr.bf16.mxu0 0
      %693 = vmatmul.mubr.bf16.gmra.mrb[0].mxu0 %v484
      %v694 = vpop.f32.mrb[0].mxu0
      %v695 = vadd.f32 0.0, %v694
      %v696 = vpop.f32.mrb[0].mxu0
      %v697 = vpop.f32.mrb[0].mxu0
      %v698 = vadd.f32 0.0, %v697
      %v699 = vpop.f32.mrb[0].mxu0
      %700 = vmatprep.mubr.bf16.mxu0 0
      %701 = vmatmul.mubr.bf16.gmra.mrb[0].mxu0 %v487
      %v702 = vpop.f32.mrb[0].mxu0
      %v703 = vadd.f32 0.0, %v702
      %v704 = vpop.f32.mrb[0].mxu0
      %v705 = vpop.f32.mrb[0].mxu0
      %v706 = vadd.f32 0.0, %v705
      %v707 = vpop.f32.mrb[0].mxu0
      %708 = vmatprep.mubr.bf16.mxu0 0
      %709 = vmatmul.mubr.bf16.gmra.mrb[0].mxu0 %v490
      %v710 = vpop.f32.mrb[0].mxu0
      %v711 = vadd.f32 0.0, %v710
      %v712 = vpop.f32.mrb[0].mxu0
      %v713 = vpop.f32.mrb[0].mxu0
      %v714 = vadd.f32 0.0, %v713
      %v715 = vpop.f32.mrb[0].mxu0
      %716 = vdwg.mxu0
      %v717 = vpack.c.bf16 %v530, %v527
      %v718 = vpack.c.bf16 %v538, %v535
      %v719 = vpack.c.bf16 %v546, %v543
      %v720 = vpack.c.bf16 %v554, %v551
      %v721 = vpack.c.bf16 %v562, %v559
      %v722 = vpack.c.bf16 %v570, %v567
      %v723 = vpack.c.bf16 %v578, %v575
      %v724 = vpack.c.bf16 %v586, %v583
      %v725 = vpack.c.bf16 %v594, %v591
      %v726 = vpack.c.bf16 %v602, %v599
      %v727 = vpack.c.bf16 %v610, %v607
      %v728 = vpack.c.bf16 %v618, %v615
      %v729 = vpack.c.bf16 %v626, %v623
      %v730 = vpack.c.bf16 %v634, %v631
      %v731 = vpack.c.bf16 %v642, %v639
      %v732 = vpack.c.bf16 %v650, %v647
      %v733 = vpack.c.bf16 %v658, %v655
      %v734 = vpack.c.bf16 %v666, %v663
      %v735 = vpack.c.bf16 %v674, %v671
      %v736 = vpack.c.bf16 %v682, %v679
      %v737 = vpack.c.bf16 %v690, %v687
      %v738 = vpack.c.bf16 %v698, %v695
      %v739 = vpack.c.bf16 %v706, %v703
      %v740 = vpack.c.bf16 %v714, %v711
      %v741 = vld [vmem:[%s203] sm:$0xff]
      %v742 = vld [vmem:[%s203 + $0x8] sm:$0xff]
      %v743 = vld [vmem:[%s203 + $0x10] sm:$0xff]
      %v744 = vld [vmem:[%s203 + $0x18] sm:$0xff]
      %v745 = vld [vmem:[%s203 + $0x20] sm:$0xff]
      %v746 = vld [vmem:[%s203 + $0x28] sm:$0xff]
      %v747 = vld [vmem:[%s203 + $0x30] sm:$0xff]
      %v748 = vld [vmem:[%s203 + $0x38] sm:$0xff]
      %v749 = vld [vmem:[%s203 + $0x40] sm:$0xff]
      %v750 = vld [vmem:[%s203 + $0x48] sm:$0xff]
      %v751 = vld [vmem:[%s203 + $0x50] sm:$0xff]
      %v752 = vld [vmem:[%s203 + $0x58] sm:$0xff]
      %v753 = vld [vmem:[%s203 + $0x60] sm:$0xff]
      %v754 = vld [vmem:[%s203 + $0x68] sm:$0xff]
      %v755 = vld [vmem:[%s203 + $0x70] sm:$0xff]
      %v756 = vld [vmem:[%s203 + $0x78] sm:$0xff]
      %v757 = vld [vmem:[%s203 + $0x80] sm:$0xff]
      %v758 = vld [vmem:[%s203 + $0x88] sm:$0xff]
      %v759 = vld [vmem:[%s203 + $0x90] sm:$0xff]
      %v760 = vld [vmem:[%s196] sm:$0xff]
      %v761 = vld [vmem:[%s196 + $0x8] sm:$0xf]
      %v762 = vld [vmem:[%s196 + $0xc] sm:$0xff]
      %v763 = vld [vmem:[%s196 + $0x14] sm:$0xf]
      %v764 = vld [vmem:[%s196 + $0x18] sm:$0xff]
      %v765 = vld [vmem:[%s196 + $0x20] sm:$0xf]
      %v766 = vld [vmem:[%s196 + $0x24] sm:$0xff]
      %v767 = vld [vmem:[%s196 + $0x2c] sm:$0xf]
      %v768 = vld [vmem:[%s196 + $0x30] sm:$0xff]
      %v769 = vld [vmem:[%s196 + $0x38] sm:$0xf]
      %v770 = vld [vmem:[%s196 + $0x3c] sm:$0xff]
      %v771 = vld [vmem:[%s196 + $0x44] sm:$0xf]
      %v772 = vld [vmem:[%s196 + $0x48] sm:$0xff]
      %v773 = vld [vmem:[%s196 + $0x50] sm:$0xf]
      %v774 = vld [vmem:[%s196 + $0x54] sm:$0xff]
      %v775 = vld [vmem:[%s196 + $0x5c] sm:$0xf]
      %v776 = vld [vmem:[%s196 + $0x60] sm:$0xff]
      %v777 = vld [vmem:[%s196 + $0x68] sm:$0xf]
      %v778 = vld [vmem:[%s196 + $0x6c] sm:$0xff]
      %v779 = vld [vmem:[%s196 + $0x74] sm:$0xf]
      %v780 = vld [vmem:[%s196 + $0x78] sm:$0xff]
      %v781 = vld [vmem:[%s196 + $0x80] sm:$0xf]
      %v782 = vld [vmem:[%s196 + $0x84] sm:$0xff]
      %v783 = vld [vmem:[%s196 + $0x8c] sm:$0xf]
      %v784 = vld [vmem:[%s196 + $0x90] sm:$0xff]
      %v785 = vld [vmem:[%s196 + $0x98] sm:$0xf]
      %v786 = vld [vmem:[%s196 + $0x9c] sm:$0xff]
      %v787 = vld [vmem:[%s196 + $0xa4] sm:$0xf]
      %v788 = vld [vmem:[%s196 + $0xa8] sm:$0xff]
      %v789 = vld [vmem:[%s196 + $0xb0] sm:$0xf]
      %v790 = vld [vmem:[%s196 + $0xb4] sm:$0xff]
      %v791 = vld [vmem:[%s196 + $0xbc] sm:$0xf]
      %v792 = vld [vmem:[%s196 + $0xc0] sm:$0xff]
      %v793 = vld [vmem:[%s196 + $0xc8] sm:$0xf]
      %v794 = vld [vmem:[%s196 + $0xcc] sm:$0xff]
      %v795 = vld [vmem:[%s196 + $0xd4] sm:$0xf]
      %v796 = vld [vmem:[%s196 + $0xd8] sm:$0xff]
      %v797 = vld [vmem:[%s196 + $0xe0] sm:$0xf]
      %v836 = vunpack.c.l.b16 %v760
      %v837 = vunpack.c.h.b16 %v760
      %v838 = vunpack.c.l.b16 %v761
      %v839 = vunpack.c.l.b16 %v762
      %v840 = vunpack.c.h.b16 %v762
      %v841 = vunpack.c.l.b16 %v763
      %v842 = vunpack.c.l.b16 %v764
      %v843 = vunpack.c.h.b16 %v764
      %v844 = vunpack.c.l.b16 %v765
      %v845 = vunpack.c.l.b16 %v766
      %v846 = vunpack.c.h.b16 %v766
      %v847 = vunpack.c.l.b16 %v767
      %v848 = vunpack.c.l.b16 %v768
      %v849 = vunpack.c.h.b16 %v768
      %v850 = vunpack.c.l.b16 %v769
      %v851 = vunpack.c.l.b16 %v770
      %v852 = vunpack.c.h.b16 %v770
      %v853 = vunpack.c.l.b16 %v771
      %v854 = vunpack.c.l.b16 %v772
      %v855 = vunpack.c.h.b16 %v772
      %v856 = vunpack.c.l.b16 %v773
      %v857 = vunpack.c.l.b16 %v774
      %v858 = vunpack.c.h.b16 %v774
      %v859 = vunpack.c.l.b16 %v775
      %v860 = vunpack.c.l.b16 %v776
      %v861 = vunpack.c.h.b16 %v776
      %v862 = vunpack.c.l.b16 %v777
      %v863 = vunpack.c.l.b16 %v778
      %v864 = vunpack.c.h.b16 %v778
      %v865 = vunpack.c.l.b16 %v779
      %v866 = vunpack.c.l.b16 %v780
      %v867 = vunpack.c.h.b16 %v780
      %v868 = vunpack.c.l.b16 %v781
      %v869 = vunpack.c.l.b16 %v782
      %v870 = vunpack.c.h.b16 %v782
      %v871 = vunpack.c.l.b16 %v783
      %v872 = vunpack.c.l.b16 %v784
      %v873 = vunpack.c.h.b16 %v784
      %v874 = vunpack.c.l.b16 %v785
      %v875 = vunpack.c.l.b16 %v786
      %v876 = vunpack.c.h.b16 %v786
      %v877 = vunpack.c.l.b16 %v787
      %v878 = vunpack.c.l.b16 %v788
      %v879 = vunpack.c.h.b16 %v788
      %v880 = vunpack.c.l.b16 %v789
      %v881 = vunpack.c.l.b16 %v790
      %v882 = vunpack.c.h.b16 %v790
      %v883 = vunpack.c.l.b16 %v791
      %v884 = vunpack.c.l.b16 %v792
      %v885 = vunpack.c.h.b16 %v792
      %v886 = vunpack.c.l.b16 %v793
      %v887 = vunpack.c.l.b16 %v794
      %v888 = vunpack.c.h.b16 %v794
      %v889 = vunpack.c.l.b16 %v795
      %v890 = vunpack.c.l.b16 %v796
      %v891 = vunpack.c.h.b16 %v796
      %v892 = vunpack.c.l.b16 %v797
      %v893 = vpack.c.b16 %v839, %v836
      %v894 = vpack.c.b16 %v840, %v837
      %v895 = vpack.c.b16 %v841, %v838
      %v896 = vpack.c.b16 %v845, %v842
      %v897 = vpack.c.b16 %v846, %v843
      %v898 = vpack.c.b16 %v847, %v844
      %v899 = vpack.c.b16 %v851, %v848
      %v900 = vpack.c.b16 %v852, %v849
      %v901 = vpack.c.b16 %v853, %v850
      %v902 = vpack.c.b16 %v857, %v854
      %v903 = vpack.c.b16 %v858, %v855
      %v904 = vpack.c.b16 %v859, %v856
      %v905 = vpack.c.b16 %v863, %v860
      %v906 = vpack.c.b16 %v864, %v861
      %v907 = vpack.c.b16 %v865, %v862
      %v908 = vpack.c.b16 %v869, %v866
      %v909 = vpack.c.b16 %v870, %v867
      %v910 = vpack.c.b16 %v871, %v868
      %v911 = vpack.c.b16 %v875, %v872
      %v912 = vpack.c.b16 %v876, %v873
      %v913 = vpack.c.b16 %v877, %v874
      %v914 = vpack.c.b16 %v881, %v878
      %v915 = vpack.c.b16 %v882, %v879
      %v916 = vpack.c.b16 %v883, %v880
      %v917 = vpack.c.b16 %v887, %v884
      %v918 = vpack.c.b16 %v888, %v885
      %v919 = vpack.c.b16 %v889, %v886
      %v920 = vpack.c.b16 %v890, %v890
      %v921 = vpack.c.b16 %v891, %v891
      %v922 = vpack.c.b16 %v892, %v892
      %953 = vmatprep.subr.bf16.mxu0 0
      %954 = vmatpush1.bf16.msra.mxu0 %v717
      %955 = vmatprep.subr.bf16.mxu0 0
      %956 = vmatpush1.bf16.msra.mxu0 %v718
      %957 = vmatprep.subr.bf16.mxu0 0
      %958 = vmatpush1.bf16.msra.mxu0 %v719
      %959 = vmatprep.subr.bf16.mxu0 0
      %960 = vmatpush1.bf16.msra.mxu0 %v720
      %961 = vmatprep.subr.bf16.mxu0 0
      %962 = vmatpush1.bf16.msra.mxu0 %v721
      %963 = vmatprep.subr.bf16.mxu0 0
      %964 = vmatpush1.bf16.msra.mxu0 %v722
      %965 = vmatprep.subr.bf16.mxu0 0
      %966 = vmatpush1.bf16.msra.mxu0 %v723
      %967 = vmatprep.subr.bf16.mxu0 0
      %968 = vmatpush1.bf16.msra.mxu0 %v724
      %969 = vmatprep.subr.bf16.mxu0 0
      %970 = vmatpush1.bf16.msra.mxu0 %v725
      %971 = vmatprep.subr.bf16.mxu0 0
      %972 = vmatpush1.bf16.msra.mxu0 %v726
      %973 = vmatprep.subr.bf16.mxu0 0
      %974 = vmatpush1.bf16.msra.mxu0 %v727
      %975 = vmatprep.subr.bf16.mxu0 0
      %976 = vmatpush1.bf16.msra.mxu0 %v728
      %977 = vmatprep.subr.bf16.mxu0 0
      %978 = vmatpush1.bf16.msra.mxu0 %v729
      %979 = vmatprep.subr.bf16.mxu0 0
      %980 = vmatpush1.bf16.msra.mxu0 %v730
      %981 = vmatprep.subr.bf16.mxu0 0
      %982 = vmatpush1.bf16.msra.mxu0 %v731
      %983 = vmatprep.subr.bf16.mxu0 0
      %984 = vmatpush1.bf16.msra.mxu0 %v732
      %985 = vmatprep.mubr.bf16.mxu0 %v894
      %986 = vmatmul.mubr.bf16.gmra.mrb[0].mxu0 %v893
      %v987 = vpop.f32.mrb[0].mxu0
      %v988 = vadd.f32 0.0, %v987
      %v989 = vpop.f32.mrb[0].mxu0
      %v990 = vpop.f32.mrb[0].mxu0
      %v991 = vadd.f32 0.0, %v990
      %v992 = vpop.f32.mrb[0].mxu0
      %993 = vmatprep.mubr.bf16.mxu0 %v897
      %994 = vmatmul.mubr.bf16.gmra.mrb[0].mxu0 %v896
      %v995 = vpop.f32.mrb[0].mxu0
      %v996 = vadd.f32 0.0, %v995
      %v997 = vpop.f32.mrb[0].mxu0
      %v998 = vpop.f32.mrb[0].mxu0
      %v999 = vadd.f32 0.0, %v998
      %v1000 = vpop.f32.mrb[0].mxu0
      %1001 = vmatprep.mubr.bf16.mxu0 %v900
      %1002 = vmatmul.mubr.bf16.gmra.mrb[0].mxu0 %v899
      %v1003 = vpop.f32.mrb[0].mxu0
      %v1004 = vadd.f32 0.0, %v1003
      %v1005 = vpop.f32.mrb[0].mxu0
      %v1006 = vpop.f32.mrb[0].mxu0
      %v1007 = vadd.f32 0.0, %v1006
      %v1008 = vpop.f32.mrb[0].mxu0
      %1009 = vmatprep.mubr.bf16.mxu0 %v903
      %1010 = vmatmul.mubr.bf16.gmra.mrb[0].mxu0 %v902
      %v1011 = vpop.f32.mrb[0].mxu0
      %v1012 = vadd.f32 0.0, %v1011
      %v1013 = vpop.f32.mrb[0].mxu0
      %v1014 = vpop.f32.mrb[0].mxu0
      %v1015 = vadd.f32 0.0, %v1014
      %v1016 = vpop.f32.mrb[0].mxu0
      %1017 = vmatprep.mubr.bf16.mxu0 %v906
      %1018 = vmatmul.mubr.bf16.gmra.mrb[0].mxu0 %v905
      %v1019 = vpop.f32.mrb[0].mxu0
      %v1020 = vadd.f32 0.0, %v1019
      %v1021 = vpop.f32.mrb[0].mxu0
      %v1022 = vpop.f32.mrb[0].mxu0
      %v1023 = vadd.f32 0.0, %v1022
      %v1024 = vpop.f32.mrb[0].mxu0
      %1025 = vmatprep.mubr.bf16.mxu0 %v909
      %1026 = vmatmul.mubr.bf16.gmra.mrb[0].mxu0 %v908
      %v1027 = vpop.f32.mrb[0].mxu0
      %v1028 = vadd.f32 0.0, %v1027
      %v1029 = vpop.f32.mrb[0].mxu0
      %v1030 = vpop.f32.mrb[0].mxu0
      %v1031 = vadd.f32 0.0, %v1030
      %v1032 = vpop.f32.mrb[0].mxu0
      %1033 = vmatprep.mubr.bf16.mxu0 %v912
      %1034 = vmatmul.mubr.bf16.gmra.mrb[0].mxu0 %v911
      %v1035 = vpop.f32.mrb[0].mxu0
      %v1036 = vadd.f32 0.0, %v1035
      %v1037 = vpop.f32.mrb[0].mxu0
      %v1038 = vpop.f32.mrb[0].mxu0
      %v1039 = vadd.f32 0.0, %v1038
      %v1040 = vpop.f32.mrb[0].mxu0
      %1041 = vmatprep.mubr.bf16.mxu0 %v915
      %1042 = vmatmul.mubr.bf16.gmra.mrb[0].mxu0 %v914
      %v1043 = vpop.f32.mrb[0].mxu0
      %v1044 = vadd.f32 0.0, %v1043
      %v1045 = vpop.f32.mrb[0].mxu0
      %v1046 = vpop.f32.mrb[0].mxu0
      %v1047 = vadd.f32 0.0, %v1046
      %v1048 = vpop.f32.mrb[0].mxu0
      %1049 = vmatprep.mubr.bf16.mxu0 %v918
      %1050 = vmatmul.mubr.bf16.gmra.mrb[0].mxu0 %v917
      %v1051 = vpop.f32.mrb[0].mxu0
      %v1052 = vadd.f32 0.0, %v1051
      %v1053 = vpop.f32.mrb[0].mxu0
      %v1054 = vpop.f32.mrb[0].mxu0
      %v1055 = vadd.f32 0.0, %v1054
      %v1056 = vpop.f32.mrb[0].mxu0
      %1057 = vmatprep.mubr.bf16.mxu0 %v921
      %1058 = vmatmul.mubr.bf16.gmra.mrb[0].mxu0 %v920
      %v1059 = vpop.f32.mrb[0].mxu0
      %v1060 = vadd.f32 0.0, %v1059
      %v1061 = vpop.f32.mrb[0].mxu0
      %v1062 = vpop.f32.mrb[0].mxu0
      %v1063 = vpop.f32.mrb[0].mxu0
      %1064 = vdwg.mxu0
      %1065 = vmatprep.subr.bf16.mxu0 0
      %1066 = vmatpush1.bf16.msra.mxu0 %v733
      %1067 = vmatprep.subr.bf16.mxu0 0
      %1068 = vmatpush1.bf16.msra.mxu0 %v734
      %1069 = vmatprep.subr.bf16.mxu0 0
      %1070 = vmatpush1.bf16.msra.mxu0 %v735
      %1071 = vmatprep.subr.bf16.mxu0 0
      %1072 = vmatpush1.bf16.msra.mxu0 %v736
      %1073 = vmatprep.subr.bf16.mxu0 0
      %1074 = vmatpush1.bf16.msra.mxu0 %v737
      %1075 = vmatprep.subr.bf16.mxu0 0
      %1076 = vmatpush1.bf16.msra.mxu0 %v738
      %1077 = vmatprep.subr.bf16.mxu0 0
      %1078 = vmatpush1.bf16.msra.mxu0 %v739
      %1079 = vmatprep.subr.bf16.mxu0 0
      %1080 = vmatpush1.bf16.msra.mxu0 %v740
      %1081 = vmatprep.subr.bf16.mxu0 0
      %1082 = vmatpush1.bf16.msra.mxu0 0
      %1083 = vmatprep.subr.bf16.mxu0 0
      %1084 = vmatpush1.bf16.msra.mxu0 0
      %1085 = vmatprep.subr.bf16.mxu0 0
      %1086 = vmatpush1.bf16.msra.mxu0 0
      %1087 = vmatprep.subr.bf16.mxu0 0
      %1088 = vmatpush1.bf16.msra.mxu0 0
      %1089 = vmatprep.subr.bf16.mxu0 0
      %1090 = vmatpush1.bf16.msra.mxu0 0
      %1091 = vmatprep.subr.bf16.mxu0 0
      %1092 = vmatpush1.bf16.msra.mxu0 0
      %1093 = vmatprep.subr.bf16.mxu0 0
      %1094 = vmatpush1.bf16.msra.mxu0 0
      %1095 = vmatprep.subr.bf16.mxu0 0
      %1096 = vmatpush1.bf16.msra.mxu0 0
      %1097 = vmatprep.mubr.bf16.mxu0 0
      %1098 = vmatmul.mubr.bf16.gmra.mrb[0].mxu0 %v895
      %v1099 = vpop.f32.mrb[0].mxu0
      %v1100 = vadd.f32 %v988, %v1099
      %v1101 = vpop.f32.mrb[0].mxu0
      %v1102 = vpop.f32.mrb[0].mxu0
      %v1103 = vadd.f32 %v991, %v1102
      %v1104 = vpop.f32.mrb[0].mxu0
      %1105 = vmatprep.mubr.bf16.mxu0 0
      %1106 = vmatmul.mubr.bf16.gmra.mrb[0].mxu0 %v898
      %v1107 = vpop.f32.mrb[0].mxu0
      %v1108 = vadd.f32 %v996, %v1107
      %v1109 = vpop.f32.mrb[0].mxu0
      %v1110 = vpop.f32.mrb[0].mxu0
      %v1111 = vadd.f32 %v999, %v1110
      %v1112 = vpop.f32.mrb[0].mxu0
      %1113 = vmatprep.mubr.bf16.mxu0 0
      %1114 = vmatmul.mubr.bf16.gmra.mrb[0].mxu0 %v901
      %v1115 = vpop.f32.mrb[0].mxu0
      %v1116 = vadd.f32 %v1004, %v1115
      %v1117 = vpop.f32.mrb[0].mxu0
      %v1118 = vpop.f32.mrb[0].mxu0
      %v1119 = vadd.f32 %v1007, %v1118
      %v1120 = vpop.f32.mrb[0].mxu0
      %1121 = vmatprep.mubr.bf16.mxu0 0
      %1122 = vmatmul.mubr.bf16.gmra.mrb[0].mxu0 %v904
      %v1123 = vpop.f32.mrb[0].mxu0
      %v1124 = vadd.f32 %v1012, %v1123
      %v1125 = vpop.f32.mrb[0].mxu0
      %v1126 = vpop.f32.mrb[0].mxu0
      %v1127 = vadd.f32 %v1015, %v1126
      %v1128 = vpop.f32.mrb[0].mxu0
      %1129 = vmatprep.mubr.bf16.mxu0 0
      %1130 = vmatmul.mubr.bf16.gmra.mrb[0].mxu0 %v907
      %v1131 = vpop.f32.mrb[0].mxu0
      %v1132 = vadd.f32 %v1020, %v1131
      %v1133 = vpop.f32.mrb[0].mxu0
      %v1134 = vpop.f32.mrb[0].mxu0
      %v1135 = vadd.f32 %v1023, %v1134
      %v1136 = vpop.f32.mrb[0].mxu0
      %1137 = vmatprep.mubr.bf16.mxu0 0
      %1138 = vmatmul.mubr.bf16.gmra.mrb[0].mxu0 %v910
      %v1139 = vpop.f32.mrb[0].mxu0
      %v1140 = vadd.f32 %v1028, %v1139
      %v1141 = vpop.f32.mrb[0].mxu0
      %v1142 = vpop.f32.mrb[0].mxu0
      %v1143 = vadd.f32 %v1031, %v1142
      %v1144 = vpop.f32.mrb[0].mxu0
      %1145 = vmatprep.mubr.bf16.mxu0 0
      %1146 = vmatmul.mubr.bf16.gmra.mrb[0].mxu0 %v913
      %v1147 = vpop.f32.mrb[0].mxu0
      %v1148 = vadd.f32 %v1036, %v1147
      %v1149 = vpop.f32.mrb[0].mxu0
      %v1150 = vpop.f32.mrb[0].mxu0
      %v1151 = vadd.f32 %v1039, %v1150
      %v1152 = vpop.f32.mrb[0].mxu0
      %1153 = vmatprep.mubr.bf16.mxu0 0
      %1154 = vmatmul.mubr.bf16.gmra.mrb[0].mxu0 %v916
      %v1155 = vpop.f32.mrb[0].mxu0
      %v1156 = vadd.f32 %v1044, %v1155
      %v1157 = vpop.f32.mrb[0].mxu0
      %v1158 = vpop.f32.mrb[0].mxu0
      %v1159 = vadd.f32 %v1047, %v1158
      %v1160 = vpop.f32.mrb[0].mxu0
      %1161 = vmatprep.mubr.bf16.mxu0 0
      %1162 = vmatmul.mubr.bf16.gmra.mrb[0].mxu0 %v919
      %v1163 = vpop.f32.mrb[0].mxu0
      %v1164 = vadd.f32 %v1052, %v1163
      %v1165 = vpop.f32.mrb[0].mxu0
      %v1166 = vpop.f32.mrb[0].mxu0
      %v1167 = vadd.f32 %v1055, %v1166
      %v1168 = vpop.f32.mrb[0].mxu0
      %1169 = vmatprep.mubr.bf16.mxu0 0
      %1170 = vmatmul.mubr.bf16.gmra.mrb[0].mxu0 %v922
      %v1171 = vpop.f32.mrb[0].mxu0
      %v1172 = vadd.f32 %v1060, %v1171
      %v1173 = vpop.f32.mrb[0].mxu0
      %v1174 = vpop.f32.mrb[0].mxu0
      %v1175 = vpop.f32.mrb[0].mxu0
      %1176 = vdwg.mxu0
      %v1177 = vadd.f32 %v741, %v1100
      %v1178 = vadd.f32 %v742, %v1103
      %v1179 = vadd.f32 %v743, %v1108
      %v1180 = vadd.f32 %v744, %v1111
      %v1181 = vadd.f32 %v745, %v1116
      %v1182 = vadd.f32 %v746, %v1119
      %v1183 = vadd.f32 %v747, %v1124
      %v1184 = vadd.f32 %v748, %v1127
      %v1185 = vadd.f32 %v749, %v1132
      %v1186 = vadd.f32 %v750, %v1135
      %v1187 = vadd.f32 %v751, %v1140
      %v1188 = vadd.f32 %v752, %v1143
      %v1189 = vadd.f32 %v753, %v1148
      %v1190 = vadd.f32 %v754, %v1151
      %v1191 = vadd.f32 %v755, %v1156
      %v1192 = vadd.f32 %v756, %v1159
      %v1193 = vadd.f32 %v757, %v1164
      %v1194 = vadd.f32 %v758, %v1167
      %v1195 = vadd.f32 %v759, %v1172
      %1196 = vst.msk [vmem:[%s203] sm:$0xff] %vm419, %v1177
      %1197 = vst.msk [vmem:[%s203 + $0x8] sm:$0xff] %vm419, %v1178
      %1198 = vst.msk [vmem:[%s203 + $0x10] sm:$0xff] %vm419, %v1179
      %1199 = vst.msk [vmem:[%s203 + $0x18] sm:$0xff] %vm419, %v1180
      %1200 = vst.msk [vmem:[%s203 + $0x20] sm:$0xff] %vm419, %v1181
      %1201 = vst.msk [vmem:[%s203 + $0x28] sm:$0xff] %vm419, %v1182
      %1202 = vst.msk [vmem:[%s203 + $0x30] sm:$0xff] %vm419, %v1183
      %1203 = vst.msk [vmem:[%s203 + $0x38] sm:$0xff] %vm419, %v1184
      %1204 = vst.msk [vmem:[%s203 + $0x40] sm:$0xff] %vm419, %v1185
      %1205 = vst.msk [vmem:[%s203 + $0x48] sm:$0xff] %vm419, %v1186
      %1206 = vst.msk [vmem:[%s203 + $0x50] sm:$0xff] %vm419, %v1187
      %1207 = vst.msk [vmem:[%s203 + $0x58] sm:$0xff] %vm419, %v1188
      %1208 = vst.msk [vmem:[%s203 + $0x60] sm:$0xff] %vm419, %v1189
      %1209 = vst.msk [vmem:[%s203 + $0x68] sm:$0xff] %vm419, %v1190
      %1210 = vst.msk [vmem:[%s203 + $0x70] sm:$0xff] %vm419, %v1191
      %1211 = vst.msk [vmem:[%s203 + $0x78] sm:$0xff] %vm419, %v1192
      %1212 = vst.msk [vmem:[%s203 + $0x80] sm:$0xff] %vm419, %v1193
      %1213 = vst.msk [vmem:[%s203 + $0x88] sm:$0xff] %vm419, %v1194
      %1214 = vst.msk [vmem:[%s203 + $0x90] sm:$0xff] %vm419, %v1195
      %s1215 = smul.u32 19, %s18
      %p1216 = scmp.lt.s32.totalorder %s1215, 37
      %s1217 = scalar_select %p1216, %s1215, 37
      %s1218 = smul.addr %s1217, 8
      %s1219 = scalar_lea.vmem %s3, %s1218
      // Predicated region
      $region37: #{evolve_gcno_forward.3} parent=31 // pred_check
        %p1220 = pneg %p114
      $region38: #{evolve_gcno_forward.3} parent=31 // pred_check_branch
        %1222 = sbr.rel (%p1220) target = $region40
      $region39: #{evolve_gcno_forward.3} parent=31 // pred_region
        %s1223 = smul.u32 19, %s18
      $region40: #{evolve_gcno_forward.3} parent=31 // pred_fallthru
        _
    $region32: #{evolve_gcno_forward.3} parent=5 // pred_fallthru
      _
    %p1224 = scmp.le.s32.totalorder 2, %s9
    // Predicated region
    $region41: #{evolve_gcno_forward.3} parent=5 // pred_check
      %p1225 = pneg %p1224
    $region42: #{evolve_gcno_forward.3} parent=5 // pred_check_branch
      %1227 = sbr.rel (%p1225) target = $region44
    $region43: #{evolve_gcno_forward.3} parent=5 // pred_region
      %s1228 = ssub.s32 %s9, 2
      // Predicated region
      $region45: #{evolve_gcno_forward.3} parent=43 // pred_check
        %p1229 = pneg %p120
      $region46: #{evolve_gcno_forward.3} parent=43 // pred_check_branch
        %1231 = sbr.rel (%p1229) target = $region48
      $region47: #{evolve_gcno_forward.3} parent=43 // pred_region
        %s1232 = smul.u32 19, %s20
        %p1233 = scmp.lt.s32.totalorder %s1232, 37
        %s1234 = scalar_select %p1233, %s1232, 37
        %s1235 = smul.addr %s1234, 8
        %s1236 = scalar_lea.vmem %s3, %s1235
      $region48: #{evolve_gcno_forward.3} parent=43 // pred_fallthru
        _
    $region44: #{evolve_gcno_forward.3} parent=5 // pred_fallthru
      _
  $region6: #{evolve_gcno_forward.3} parent=0 // loop_footer
    %s13 = sadd.s32 1, %s9
  $region7: #{evolve_gcno_forward.3} parent=0 // loop_footer_branch
    %8 = sbr.rel target = $region3
  $region8: #{evolve_gcno_forward.3} parent=0 // loop_exit
    _

</llo_original>
